<compile_context>
chip_gen: v7x
topology: tpu7x:2x2x1
jax: 0.10.0
libtpu: 0.0.40
codegen_flags: <defaults>
</compile_context>

<pallas_src>
import functools

import jax
import jax.numpy as jnp
from jax.experimental import pallas as pl
from jax.experimental.pallas import tpu as pltpu

LANE = 128


# ---------------------------------------------------------------------------
# helpers
# ---------------------------------------------------------------------------
def _rup(n, m=LANE):
    return ((n + m - 1) // m) * m


def _pad2(a, rows, cols, dtype=None):
    out = jnp.pad(a, ((0, rows - a.shape[0]), (0, cols - a.shape[1])))
    return out if dtype is None else out.astype(dtype)


def _vspec(shape):
    nd = len(shape)
    return pl.BlockSpec(shape, lambda *_: (0,) * nd)


# ---------------------------------------------------------------------------
# fused kernel: encoder + student projector + teacher projector + DINO loss
# ---------------------------------------------------------------------------
def dino_fused_kernel(
    x_ref, xt_ref, z_ref,                                            # activations
    ew_ref, eb_ref,                                                  # teacher encoder
    sw1_ref, sb1_ref, sg_ref, sbt_ref, sw2_ref, sb2_ref, sw3_ref,    # student proj
    tw1_ref, tb1_ref, tg_ref, tbt_ref, tw2_ref, tb2_ref, tw3_ref,    # teacher proj
    center_ref,
    stats_ref, newc_ref,
    *, student_temp, teacher_temp, center_momentum, n_classes):
    f32 = jnp.float32
    bf16 = jnp.bfloat16

    # ---- teacher encoder: linear on the two flattened views (no concat) ----
    zt_x = jnp.dot(x_ref[...], ew_ref[...], preferred_element_type=f32) + eb_ref[...]
    zt_a = jnp.dot(xt_ref[...], ew_ref[...], preferred_element_type=f32) + eb_ref[...]

    # ---- fused MLP projector: Linear -> BatchNorm1d(train, stats over ALL
    #      chunks) -> GELU(exact) -> Linear -> L2-normalize (is_cosine) ->
    #      weight-normalized prototype Linear (no bias) ----------------------
    def projector(chunks, w1, b1, g, beta, w2, b2, w3):
        n_rows = sum(c.shape[0] for c in chunks)
        hs = [jnp.dot(c.astype(bf16), w1[...], preferred_element_type=f32) + b1[...]
              for c in chunks]
        mu = sum(jnp.sum(h, axis=0, keepdims=True) for h in hs) * (1.0 / n_rows)
        var = sum(jnp.sum((h - mu) ** 2, axis=0, keepdims=True)
                  for h in hs) * (1.0 / n_rows)
        inv_std = jax.lax.rsqrt(var + 1e-5)        # BN train mode, biased var
        outs = []
        for h in hs:
            h = (h - mu) * inv_std * g[...] + beta[...]
            h = 0.5 * h * (1.0 + jax.lax.erf(h * 0.7071067811865476))  # exact GELU
            bn = jnp.dot(h.astype(bf16), w2[...], preferred_element_type=f32) + b2[...]
            bn = bn * jax.lax.rsqrt(jnp.maximum(
                jnp.sum(bn * bn, axis=-1, keepdims=True), 1e-24))       # F.normalize
            outs.append(jnp.dot(bn.astype(bf16), w3[...], preferred_element_type=f32))
        return outs

    (student_M,) = projector([z_ref[...]], sw1_ref, sb1_ref, sg_ref, sbt_ref,
                             sw2_ref, sb2_ref, sw3_ref)                # [2B, Kp]
    t_Mx, t_Ma = projector([zt_x, zt_a], tw1_ref, tb1_ref, tg_ref, tbt_ref,
                           tw2_ref, tb2_ref, tw3_ref)                  # [B, Kp] each

    half = student_M.shape[0] // 2
    s_x, s_a = student_M[:half], student_M[half:]
    c0 = center_ref[...]                                               # [1, Kp]
    Kp = c0.shape[-1]

    col = jax.lax.broadcasted_iota(jnp.int32, (1, Kp), 1)
    valid = col < n_classes     # mask lane-padding classes out of the softmaxes
    NEG = -1e30                 # finite "-inf": exp underflows to 0, 0*finite == 0

    def asym(Ms, Mt, center):
        logits_s = jnp.where(valid, Ms * (1.0 / student_temp), NEG)
        logits_t = jnp.where(valid, (Mt - center) * (1.0 / teacher_temp), NEG)
        # teacher softmax; entropy kept in log-domain (no 0 * -inf NaN)
        mt = jnp.max(logits_t, axis=-1, keepdims=True)
        et = jnp.exp(logits_t - mt)
        st = jnp.sum(et, axis=-1, keepdims=True)
        p = et * pl.reciprocal(st, approx=True)       # EUP slot, frees VALU
        log_p = logits_t - mt - jnp.log(st)
        # student log-softmax
        ms = jnp.max(logits_s, axis=-1, keepdims=True)
        lse = jnp.log(jnp.sum(jnp.exp(logits_s - ms), axis=-1, keepdims=True)) + ms
        log_q = logits_s - lse
        ce = -jnp.mean(jnp.sum(p * log_q, axis=-1, keepdims=True),
                       axis=0, keepdims=True)          # [1, 1]
        ent = -jnp.mean(jnp.sum(p * log_p, axis=-1, keepdims=True),
                        axis=0, keepdims=True)         # [1, 1]
        # update_center() is called INSIDE asymmetric_loss in the reference
        batch_center = jnp.mean(Mt, axis=0, keepdims=True)
        new_center = center * center_momentum + batch_center * (1.0 - center_momentum)
        return ce, ent, new_center

    ce1, h1, c1 = asym(s_x, t_Ma, c0)    # second call sees the updated center,
    ce2, h2, c2 = asym(s_a, t_Mx, c1)    # exactly like the PyTorch module

    loss = (ce1 + ce2) * 0.5             # [1, 1]
    ent = (h1 + h2) * 0.5                # [1, 1]
    # pack both scalars into one lane-dense (1, 128) row (no padded (1,1) DMAs)
    lane = jax.lax.broadcasted_iota(jnp.int32, (1, LANE), 1)
    stats_ref[...] = (jnp.where(lane == 0, loss, 0.0)
                      + jnp.where(lane == 1, ent, 0.0))
    newc_ref[...] = c2


def dino_forward_fused(x_flat, xt_flat, z, enc, sproj, tproj, center, *,
                       student_temp, teacher_temp, center_momentum, n_classes):
    Kp = center.shape[1]
    kern = functools.partial(
        dino_fused_kernel,
        student_temp=float(student_temp),
        teacher_temp=float(teacher_temp),
        center_momentum=float(center_momentum),
        n_classes=int(n_classes),
    )
    inputs = (
        x_flat, xt_flat, z,
        enc["w"], enc["b"],
        sproj["w1"], sproj["b1"], sproj["gamma"], sproj["beta"],
        sproj["w2"], sproj["b2"], sproj["w3"],
        tproj["w1"], tproj["b1"], tproj["gamma"], tproj["beta"],
        tproj["w2"], tproj["b2"], tproj["w3"],
        center,
    )
    stats, new_center = pl.pallas_call(
        kern,
        out_shape=(
            jax.ShapeDtypeStruct((1, LANE), jnp.float32),   # [loss, ent, 0...]
            jax.ShapeDtypeStruct((1, Kp), jnp.float32),     # updated center
        ),
        grid=(1,),
        in_specs=[_vspec(a.shape) for a in inputs],
        out_specs=(_vspec((1, LANE)), _vspec((1, Kp))),
        input_output_aliases={19: 1},                       # center -> new_center
        compiler_params=pltpu.CompilerParams(
            dimension_semantics=("arbitrary",)),
    )(*inputs)
    return stats[0, 0], stats[0, 1], new_center


# ---------------------------------------------------------------------------
# parameter construction (zero-padded to 128-lane multiples, weights in bf16)
# ---------------------------------------------------------------------------
def init_projector_params(key, in_dim, hid_dim, bottleneck, out_dim,
                          in_p, hid_p, bot_p, out_p):
    k1, k2, k3 = jax.random.split(key, 3)
    w1 = jax.random.normal(k1, (in_dim, hid_dim), jnp.float32) * 0.02
    w2 = jax.random.normal(k2, (hid_dim, bottleneck), jnp.float32) * 0.02
    w3 = jax.random.normal(k3, (bottleneck, out_dim), jnp.float32) * 0.02
    # weight-norm with g=1 (DINO prototype layer): unit-norm prototype vectors
    w3 = w3 / jnp.maximum(jnp.sqrt(jnp.sum(w3 * w3, axis=0, keepdims=True)), 1e-12)
    return dict(
        w1=_pad2(w1, in_p, hid_p, jnp.bfloat16),
        b1=jnp.zeros((1, hid_p), jnp.float32),
        gamma=_pad2(jnp.ones((1, hid_dim), jnp.float32), 1, hid_p),
        beta=jnp.zeros((1, hid_p), jnp.float32),
        w2=_pad2(w2, hid_p, bot_p, jnp.bfloat16),
        b2=jnp.zeros((1, bot_p), jnp.float32),
        w3=_pad2(w3, bot_p, out_p, jnp.bfloat16),
    )


# ---------------------------------------------------------------------------
# DINO module (JAX/Pallas version)
# ---------------------------------------------------------------------------
class DinoPallas:
    def __init__(self, key, z_dim, n_classes, img_flat_dim, hid_dim=64,
                 bottleneck=32, student_temperature=0.1, center_momentum=0.9,
                 warmup_teacher_temp=0.04, warmup_teacher_temp_epochs=50,
                 teacher_temperature=0.07, n_epochs=100):
        ke, kp, kt = jax.random.split(key, 3)
        self.student_temperature = student_temperature
        self.center_momentum = center_momentum
        self.n_classes = n_classes
        # lane-dense padded feature dims (multiples of 128)
        self.Dp = _rup(img_flat_dim)
        self.Zp = _rup(z_dim)
        self.Hp = _rup(hid_dim)
        self.Bp = _rup(bottleneck)
        self.Kp = _rup(n_classes)
        self.center = jnp.zeros((1, self.Kp), jnp.float32)
        # teacher temperature schedule (linear warmup then constant)
        warm = [warmup_teacher_temp
                + (teacher_temperature - warmup_teacher_temp)
                * i / max(warmup_teacher_temp_epochs - 1, 1)
                for i in range(warmup_teacher_temp_epochs)]
        self.teacher_temp_schedule = warm + [teacher_temperature] * (
            n_epochs - warmup_teacher_temp_epochs)
        self.current_epoch = 0
        # teacher encoder (deepcopy of the provided encoder -> own params here)
        enc_w = jax.random.normal(ke, (img_flat_dim, z_dim), jnp.float32) * 0.02
        self.enc = dict(w=_pad2(enc_w, self.Dp, self.Zp, jnp.bfloat16),
                        b=jnp.zeros((1, self.Zp), jnp.float32))
        # student projector and (frozen) teacher projector
        self.proj = init_projector_params(kp, z_dim, hid_dim, bottleneck, n_classes,
                                          self.Zp, self.Hp, self.Bp, self.Kp)
        self.teacher_proj = init_projector_params(kt, z_dim, hid_dim, bottleneck,
                                                  n_classes, self.Zp, self.Hp,
                                                  self.Bp, self.Kp)

    @property
    def teacher_temperature(self):
        i = min(self.current_epoch, len(self.teacher_temp_schedule) - 1)
        return self.teacher_temp_schedule[i]

    def forward(self, z, x, x_tilde, current_epoch=0):
        self.current_epoch = current_epoch
        bx = x.shape[0]
        # flatten NCHW row-major (PyTorch layout), pad to lane multiples, bf16
        x_flat = _pad2(x.reshape(bx, -1).astype(jnp.float32), bx, self.Dp,
                       jnp.bfloat16)
        xt_flat = _pad2(x_tilde.reshape(bx, -1).astype(jnp.float32), bx, self.Dp,
                        jnp.bfloat16)
        z_p = _pad2(z.astype(jnp.float32), z.shape[0], self.Zp, jnp.bfloat16)
        loss, ent, new_center = dino_forward_fused(
            x_flat, xt_flat, z_p, self.enc, self.proj, self.teacher_proj,
            self.center,
            student_temp=self.student_temperature,
            teacher_temp=self.teacher_temperature,
            center_momentum=self.center_momentum,
            n_classes=self.n_classes,
        )
        self.center = new_center
        logs = {"CE_distill_aug": loss, "H_Mlz": ent}
        return loss, logs


# ---------------------------------------------------------------------------
# main
# ---------------------------------------------------------------------------
if __name__ == "__main__":
    # small shapes consistent with the module's forward signature
    B = 4           # batch per view  -> z has 2*B rows
    C, H, W = 4, 8, 8
    Z_DIM = 32
    N_CLASSES = 128

    key = jax.random.PRNGKey(0)
    k_mod, k_z, k_x, k_xt = jax.random.split(key, 4)

    module = DinoPallas(k_mod, z_dim=Z_DIM, n_classes=N_CLASSES,
                        img_flat_dim=C * H * W)

    z = jax.random.normal(k_z, (2 * B, Z_DIM), jnp.float32)        # [2B, z_dim]
    x = jax.random.normal(k_x, (B, C, H, W), jnp.float32)          # NCHW
    x_tilde = jax.random.normal(k_xt, (B, C, H, W), jnp.float32)   # NCHW

    loss, logs = module.forward(z, x, x_tilde, current_epoch=0)
    jax.block_until_ready(loss)
    jax.block_until_ready(logs["H_Mlz"])
    jax.block_until_ready(module.center)

    assert loss.shape == () and jnp.isfinite(loss)
    assert jnp.isfinite(logs["H_Mlz"])
    print("KERNEL_OK")
</pallas_src>

<mosaic_0001>
module attributes {stable_mosaic.version = 11 : i64} {
  func.func @dino_fused_kernel(%arg0: i32, %arg1: memref<4x256xbf16, #tpu.memory_space<vmem>>, %arg2: memref<4x256xbf16, #tpu.memory_space<vmem>>, %arg3: memref<8x128xbf16, #tpu.memory_space<vmem>>, %arg4: memref<256x128xbf16, #tpu.memory_space<vmem>>, %arg5: memref<1x128xf32, #tpu.memory_space<vmem>>, %arg6: memref<128x128xbf16, #tpu.memory_space<vmem>>, %arg7: memref<1x128xf32, #tpu.memory_space<vmem>>, %arg8: memref<1x128xf32, #tpu.memory_space<vmem>>, %arg9: memref<1x128xf32, #tpu.memory_space<vmem>>, %arg10: memref<128x128xbf16, #tpu.memory_space<vmem>>, %arg11: memref<1x128xf32, #tpu.memory_space<vmem>>, %arg12: memref<128x128xbf16, #tpu.memory_space<vmem>>, %arg13: memref<128x128xbf16, #tpu.memory_space<vmem>>, %arg14: memref<1x128xf32, #tpu.memory_space<vmem>>, %arg15: memref<1x128xf32, #tpu.memory_space<vmem>>, %arg16: memref<1x128xf32, #tpu.memory_space<vmem>>, %arg17: memref<128x128xbf16, #tpu.memory_space<vmem>>, %arg18: memref<1x128xf32, #tpu.memory_space<vmem>>, %arg19: memref<128x128xbf16, #tpu.memory_space<vmem>>, %arg20: memref<1x128xf32, #tpu.memory_space<vmem>>, %arg21: memref<1x128xf32, #tpu.memory_space<vmem>>, %arg22: memref<1x128xf32, #tpu.memory_space<vmem>>) attributes {dimension_semantics = [#tpu.dimension_semantics<arbitrary>], iteration_bounds = array<i64: 1>, scalar_prefetch = 0 : i64, scratch_operands = 0 : i64, tpu.core_type = #tpu.core_type<tc>, window_params = [{pipeline_mode = #tpu.pipeline_mode<synchronous>, transform_indices = @transform_0, window_bounds = array<i64: 4, 256>}, {pipeline_mode = #tpu.pipeline_mode<synchronous>, transform_indices = @transform_1, window_bounds = array<i64: 4, 256>}, {pipeline_mode = #tpu.pipeline_mode<synchronous>, transform_indices = @transform_2, window_bounds = array<i64: 8, 128>}, {pipeline_mode = #tpu.pipeline_mode<synchronous>, transform_indices = @transform_3, window_bounds = array<i64: 256, 128>}, {pipeline_mode = #tpu.pipeline_mode<synchronous>, transform_indices = @transform_4, window_bounds = array<i64: 1, 128>}, {pipeline_mode = #tpu.pipeline_mode<synchronous>, transform_indices = @transform_5, window_bounds = array<i64: 128, 128>}, {pipeline_mode = #tpu.pipeline_mode<synchronous>, transform_indices = @transform_6, window_bounds = array<i64: 1, 128>}, {pipeline_mode = #tpu.pipeline_mode<synchronous>, transform_indices = @transform_7, window_bounds = array<i64: 1, 128>}, {pipeline_mode = #tpu.pipeline_mode<synchronous>, transform_indices = @transform_8, window_bounds = array<i64: 1, 128>}, {pipeline_mode = #tpu.pipeline_mode<synchronous>, transform_indices = @transform_9, window_bounds = array<i64: 128, 128>}, {pipeline_mode = #tpu.pipeline_mode<synchronous>, transform_indices = @transform_10, window_bounds = array<i64: 1, 128>}, {pipeline_mode = #tpu.pipeline_mode<synchronous>, transform_indices = @transform_11, window_bounds = array<i64: 128, 128>}, {pipeline_mode = #tpu.pipeline_mode<synchronous>, transform_indices = @transform_12, window_bounds = array<i64: 128, 128>}, {pipeline_mode = #tpu.pipeline_mode<synchronous>, transform_indices = @transform_13, window_bounds = array<i64: 1, 128>}, {pipeline_mode = #tpu.pipeline_mode<synchronous>, transform_indices = @transform_14, window_bounds = array<i64: 1, 128>}, {pipeline_mode = #tpu.pipeline_mode<synchronous>, transform_indices = @transform_15, window_bounds = array<i64: 1, 128>}, {pipeline_mode = #tpu.pipeline_mode<synchronous>, transform_indices = @transform_16, window_bounds = array<i64: 128, 128>}, {pipeline_mode = #tpu.pipeline_mode<synchronous>, transform_indices = @transform_17, window_bounds = array<i64: 1, 128>}, {pipeline_mode = #tpu.pipeline_mode<synchronous>, transform_indices = @transform_18, window_bounds = array<i64: 128, 128>}, {pipeline_mode = #tpu.pipeline_mode<synchronous>, transform_indices = @transform_19, window_bounds = array<i64: 1, 128>}, {pipeline_mode = #tpu.pipeline_mode<synchronous>, transform_indices = @transform_20, window_bounds = array<i64: 1, 128>}, {pipeline_mode = #tpu.pipeline_mode<synchronous>, transform_indices = @transform_21, window_bounds = array<i64: 1, 128>}]} {
    %c0 = arith.constant 0 : index
    %c0_0 = arith.constant 0 : index
    %0 = vector.load %arg1[%c0, %c0_0] : memref<4x256xbf16, #tpu.memory_space<vmem>>, vector<4x256xbf16>
    %c0_1 = arith.constant 0 : index
    %c0_2 = arith.constant 0 : index
    %1 = vector.load %arg4[%c0_1, %c0_2] : memref<256x128xbf16, #tpu.memory_space<vmem>>, vector<256x128xbf16>
    %cst = arith.constant dense<0.000000e+00> : vector<4x128xf32>
    %2 = tpu.matmul %0, %1, %cst {dimension_numbers = #tpu.dot_dimension_numbers<[1], [0], [0], [1], [0, 0, 1, 1], [], []>} : vector<4x256xbf16>, vector<256x128xbf16>, vector<4x128xf32> -> vector<4x128xf32>
    %c0_3 = arith.constant 0 : index
    %c0_4 = arith.constant 0 : index
    %3 = vector.load %arg5[%c0_3, %c0_4] : memref<1x128xf32, #tpu.memory_space<vmem>>, vector<1x128xf32>
    %4 = vector.broadcast %3 : vector<1x128xf32> to vector<4x128xf32>
    %5 = arith.addf %2, %4 : vector<4x128xf32>
    %c0_5 = arith.constant 0 : index
    %c0_6 = arith.constant 0 : index
    %6 = vector.load %arg2[%c0_5, %c0_6] : memref<4x256xbf16, #tpu.memory_space<vmem>>, vector<4x256xbf16>
    %c0_7 = arith.constant 0 : index
    %c0_8 = arith.constant 0 : index
    %7 = vector.load %arg4[%c0_7, %c0_8] : memref<256x128xbf16, #tpu.memory_space<vmem>>, vector<256x128xbf16>
    %cst_9 = arith.constant dense<0.000000e+00> : vector<4x128xf32>
    %8 = tpu.matmul %6, %7, %cst_9 {dimension_numbers = #tpu.dot_dimension_numbers<[1], [0], [0], [1], [0, 0, 1, 1], [], []>} : vector<4x256xbf16>, vector<256x128xbf16>, vector<4x128xf32> -> vector<4x128xf32>
    %c0_10 = arith.constant 0 : index
    %c0_11 = arith.constant 0 : index
    %9 = vector.load %arg5[%c0_10, %c0_11] : memref<1x128xf32, #tpu.memory_space<vmem>>, vector<1x128xf32>
    %10 = vector.broadcast %9 : vector<1x128xf32> to vector<4x128xf32>
    %11 = arith.addf %8, %10 : vector<4x128xf32>
    %c0_12 = arith.constant 0 : index
    %c0_13 = arith.constant 0 : index
    %12 = vector.load %arg3[%c0_12, %c0_13] : memref<8x128xbf16, #tpu.memory_space<vmem>>, vector<8x128xbf16>
    %c0_14 = arith.constant 0 : index
    %c0_15 = arith.constant 0 : index
    %13 = vector.load %arg6[%c0_14, %c0_15] : memref<128x128xbf16, #tpu.memory_space<vmem>>, vector<128x128xbf16>
    %cst_16 = arith.constant dense<0.000000e+00> : vector<8x128xf32>
    %14 = tpu.matmul %12, %13, %cst_16 {dimension_numbers = #tpu.dot_dimension_numbers<[1], [0], [0], [1], [0, 0, 1, 1], [], []>} : vector<8x128xbf16>, vector<128x128xbf16>, vector<8x128xf32> -> vector<8x128xf32>
    %c0_17 = arith.constant 0 : index
    %c0_18 = arith.constant 0 : index
    %15 = vector.load %arg7[%c0_17, %c0_18] : memref<1x128xf32, #tpu.memory_space<vmem>>, vector<1x128xf32>
    %16 = vector.broadcast %15 : vector<1x128xf32> to vector<8x128xf32>
    %17 = arith.addf %14, %16 : vector<8x128xf32>
    %cst_19 = arith.constant dense<0.000000e+00> : vector<128xf32>
    %18 = vector.multi_reduction <add>, %17, %cst_19 [0] : vector<8x128xf32> to vector<128xf32>
    %19 = vector.shape_cast %18 : vector<128xf32> to vector<1x128xf32>
    %cst_20 = arith.constant 0.000000e+00 : f32
    %20 = vector.broadcast %cst_20 : f32 to vector<1x128xf32>
    %21 = arith.addf %20, %19 : vector<1x128xf32>
    %cst_21 = arith.constant 1.250000e-01 : f32
    %22 = vector.broadcast %cst_21 : f32 to vector<1x128xf32>
    %23 = arith.mulf %21, %22 : vector<1x128xf32>
    %24 = vector.broadcast %23 : vector<1x128xf32> to vector<8x128xf32>
    %25 = arith.subf %17, %24 : vector<8x128xf32>
    %26 = arith.mulf %25, %25 : vector<8x128xf32>
    %cst_22 = arith.constant dense<0.000000e+00> : vector<128xf32>
    %27 = vector.multi_reduction <add>, %26, %cst_22 [0] : vector<8x128xf32> to vector<128xf32>
    %28 = vector.shape_cast %27 : vector<128xf32> to vector<1x128xf32>
    %cst_23 = arith.constant 0.000000e+00 : f32
    %29 = vector.broadcast %cst_23 : f32 to vector<1x128xf32>
    %30 = arith.addf %29, %28 : vector<1x128xf32>
    %cst_24 = arith.constant 1.250000e-01 : f32
    %31 = vector.broadcast %cst_24 : f32 to vector<1x128xf32>
    %32 = arith.mulf %30, %31 : vector<1x128xf32>
    %cst_25 = arith.constant 9.99999974E-6 : f32
    %33 = vector.broadcast %cst_25 : f32 to vector<1x128xf32>
    %34 = arith.addf %32, %33 : vector<1x128xf32>
    %35 = math.rsqrt %34 : vector<1x128xf32>
    %36 = vector.broadcast %23 : vector<1x128xf32> to vector<8x128xf32>
    %37 = arith.subf %17, %36 : vector<8x128xf32>
    %38 = vector.broadcast %35 : vector<1x128xf32> to vector<8x128xf32>
    %39 = arith.mulf %37, %38 : vector<8x128xf32>
    %c0_26 = arith.constant 0 : index
    %c0_27 = arith.constant 0 : index
    %40 = vector.load %arg8[%c0_26, %c0_27] : memref<1x128xf32, #tpu.memory_space<vmem>>, vector<1x128xf32>
    %41 = vector.broadcast %40 : vector<1x128xf32> to vector<8x128xf32>
    %42 = arith.mulf %39, %41 : vector<8x128xf32>
    %c0_28 = arith.constant 0 : index
    %c0_29 = arith.constant 0 : index
    %43 = vector.load %arg9[%c0_28, %c0_29] : memref<1x128xf32, #tpu.memory_space<vmem>>, vector<1x128xf32>
    %44 = vector.broadcast %43 : vector<1x128xf32> to vector<8x128xf32>
    %45 = arith.addf %42, %44 : vector<8x128xf32>
    %cst_30 = arith.constant 5.000000e-01 : f32
    %46 = vector.broadcast %cst_30 : f32 to vector<8x128xf32>
    %47 = arith.mulf %46, %45 : vector<8x128xf32>
    %cst_31 = arith.constant 0.707106769 : f32
    %48 = vector.broadcast %cst_31 : f32 to vector<8x128xf32>
    %49 = arith.mulf %45, %48 : vector<8x128xf32>
    %50 = math.erf %49 : vector<8x128xf32>
    %cst_32 = arith.constant 1.000000e+00 : f32
    %51 = vector.broadcast %cst_32 : f32 to vector<8x128xf32>
    %52 = arith.addf %51, %50 : vector<8x128xf32>
    %53 = arith.mulf %47, %52 : vector<8x128xf32>
    %54 = arith.truncf %53 : vector<8x128xf32> to vector<8x128xbf16>
    %c0_33 = arith.constant 0 : index
    %c0_34 = arith.constant 0 : index
    %55 = vector.load %arg10[%c0_33, %c0_34] : memref<128x128xbf16, #tpu.memory_space<vmem>>, vector<128x128xbf16>
    %cst_35 = arith.constant dense<0.000000e+00> : vector<8x128xf32>
    %56 = tpu.matmul %54, %55, %cst_35 {dimension_numbers = #tpu.dot_dimension_numbers<[1], [0], [0], [1], [0, 0, 1, 1], [], []>} : vector<8x128xbf16>, vector<128x128xbf16>, vector<8x128xf32> -> vector<8x128xf32>
    %c0_36 = arith.constant 0 : index
    %c0_37 = arith.constant 0 : index
    %57 = vector.load %arg11[%c0_36, %c0_37] : memref<1x128xf32, #tpu.memory_space<vmem>>, vector<1x128xf32>
    %58 = vector.broadcast %57 : vector<1x128xf32> to vector<8x128xf32>
    %59 = arith.addf %56, %58 : vector<8x128xf32>
    %60 = arith.mulf %59, %59 : vector<8x128xf32>
    %cst_38 = arith.constant dense<0.000000e+00> : vector<8xf32>
    %61 = vector.multi_reduction <add>, %60, %cst_38 [1] : vector<8x128xf32> to vector<8xf32>
    %62 = vector.shape_cast %61 : vector<8xf32> to vector<8x1xf32>
    %cst_39 = arith.constant 1.000000e-24 : f32
    %63 = vector.broadcast %cst_39 : f32 to vector<8x1xf32>
    %64 = arith.maximumf %62, %63 : vector<8x1xf32>
    %65 = math.rsqrt %64 : vector<8x1xf32>
    %66 = vector.broadcast %65 : vector<8x1xf32> to vector<8x128xf32>
    %67 = arith.mulf %59, %66 : vector<8x128xf32>
    %68 = arith.truncf %67 : vector<8x128xf32> to vector<8x128xbf16>
    %c0_40 = arith.constant 0 : index
    %c0_41 = arith.constant 0 : index
    %69 = vector.load %arg12[%c0_40, %c0_41] : memref<128x128xbf16, #tpu.memory_space<vmem>>, vector<128x128xbf16>
    %cst_42 = arith.constant dense<0.000000e+00> : vector<8x128xf32>
    %70 = tpu.matmul %68, %69, %cst_42 {dimension_numbers = #tpu.dot_dimension_numbers<[1], [0], [0], [1], [0, 0, 1, 1], [], []>} : vector<8x128xbf16>, vector<128x128xbf16>, vector<8x128xf32> -> vector<8x128xf32>
    %71 = arith.truncf %5 : vector<4x128xf32> to vector<4x128xbf16>
    %c0_43 = arith.constant 0 : index
    %c0_44 = arith.constant 0 : index
    %72 = vector.load %arg13[%c0_43, %c0_44] : memref<128x128xbf16, #tpu.memory_space<vmem>>, vector<128x128xbf16>
    %cst_45 = arith.constant dense<0.000000e+00> : vector<4x128xf32>
    %73 = tpu.matmul %71, %72, %cst_45 {dimension_numbers = #tpu.dot_dimension_numbers<[1], [0], [0], [1], [0, 0, 1, 1], [], []>} : vector<4x128xbf16>, vector<128x128xbf16>, vector<4x128xf32> -> vector<4x128xf32>
    %c0_46 = arith.constant 0 : index
    %c0_47 = arith.constant 0 : index
    %74 = vector.load %arg14[%c0_46, %c0_47] : memref<1x128xf32, #tpu.memory_space<vmem>>, vector<1x128xf32>
    %75 = vector.broadcast %74 : vector<1x128xf32> to vector<4x128xf32>
    %76 = arith.addf %73, %75 : vector<4x128xf32>
    %77 = arith.truncf %11 : vector<4x128xf32> to vector<4x128xbf16>
    %c0_48 = arith.constant 0 : index
    %c0_49 = arith.constant 0 : index
    %78 = vector.load %arg13[%c0_48, %c0_49] : memref<128x128xbf16, #tpu.memory_space<vmem>>, vector<128x128xbf16>
    %cst_50 = arith.constant dense<0.000000e+00> : vector<4x128xf32>
    %79 = tpu.matmul %77, %78, %cst_50 {dimension_numbers = #tpu.dot_dimension_numbers<[1], [0], [0], [1], [0, 0, 1, 1], [], []>} : vector<4x128xbf16>, vector<128x128xbf16>, vector<4x128xf32> -> vector<4x128xf32>
    %c0_51 = arith.constant 0 : index
    %c0_52 = arith.constant 0 : index
    %80 = vector.load %arg14[%c0_51, %c0_52] : memref<1x128xf32, #tpu.memory_space<vmem>>, vector<1x128xf32>
    %81 = vector.broadcast %80 : vector<1x128xf32> to vector<4x128xf32>
    %82 = arith.addf %79, %81 : vector<4x128xf32>
    %cst_53 = arith.constant dense<0.000000e+00> : vector<128xf32>
    %83 = vector.multi_reduction <add>, %76, %cst_53 [0] : vector<4x128xf32> to vector<128xf32>
    %84 = vector.shape_cast %83 : vector<128xf32> to vector<1x128xf32>
    %cst_54 = arith.constant 0.000000e+00 : f32
    %85 = vector.broadcast %cst_54 : f32 to vector<1x128xf32>
    %86 = arith.addf %85, %84 : vector<1x128xf32>
    %cst_55 = arith.constant dense<0.000000e+00> : vector<128xf32>
    %87 = vector.multi_reduction <add>, %82, %cst_55 [0] : vector<4x128xf32> to vector<128xf32>
    %88 = vector.shape_cast %87 : vector<128xf32> to vector<1x128xf32>
    %89 = arith.addf %86, %88 : vector<1x128xf32>
    %cst_56 = arith.constant 1.250000e-01 : f32
    %90 = vector.broadcast %cst_56 : f32 to vector<1x128xf32>
    %91 = arith.mulf %89, %90 : vector<1x128xf32>
    %92 = vector.broadcast %91 : vector<1x128xf32> to vector<4x128xf32>
    %93 = arith.subf %76, %92 : vector<4x128xf32>
    %94 = arith.mulf %93, %93 : vector<4x128xf32>
    %cst_57 = arith.constant dense<0.000000e+00> : vector<128xf32>
    %95 = vector.multi_reduction <add>, %94, %cst_57 [0] : vector<4x128xf32> to vector<128xf32>
    %96 = vector.shape_cast %95 : vector<128xf32> to vector<1x128xf32>
    %cst_58 = arith.constant 0.000000e+00 : f32
    %97 = vector.broadcast %cst_58 : f32 to vector<1x128xf32>
    %98 = arith.addf %97, %96 : vector<1x128xf32>
    %99 = vector.broadcast %91 : vector<1x128xf32> to vector<4x128xf32>
    %100 = arith.subf %82, %99 : vector<4x128xf32>
    %101 = arith.mulf %100, %100 : vector<4x128xf32>
    %cst_59 = arith.constant dense<0.000000e+00> : vector<128xf32>
    %102 = vector.multi_reduction <add>, %101, %cst_59 [0] : vector<4x128xf32> to vector<128xf32>
    %103 = vector.shape_cast %102 : vector<128xf32> to vector<1x128xf32>
    %104 = arith.addf %98, %103 : vector<1x128xf32>
    %cst_60 = arith.constant 1.250000e-01 : f32
    %105 = vector.broadcast %cst_60 : f32 to vector<1x128xf32>
    %106 = arith.mulf %104, %105 : vector<1x128xf32>
    %cst_61 = arith.constant 9.99999974E-6 : f32
    %107 = vector.broadcast %cst_61 : f32 to vector<1x128xf32>
    %108 = arith.addf %106, %107 : vector<1x128xf32>
    %109 = math.rsqrt %108 : vector<1x128xf32>
    %110 = vector.broadcast %91 : vector<1x128xf32> to vector<4x128xf32>
    %111 = arith.subf %76, %110 : vector<4x128xf32>
    %112 = vector.broadcast %109 : vector<1x128xf32> to vector<4x128xf32>
    %113 = arith.mulf %111, %112 : vector<4x128xf32>
    %c0_62 = arith.constant 0 : index
    %c0_63 = arith.constant 0 : index
    %114 = vector.load %arg15[%c0_62, %c0_63] : memref<1x128xf32, #tpu.memory_space<vmem>>, vector<1x128xf32>
    %115 = vector.broadcast %114 : vector<1x128xf32> to vector<4x128xf32>
    %116 = arith.mulf %113, %115 : vector<4x128xf32>
    %c0_64 = arith.constant 0 : index
    %c0_65 = arith.constant 0 : index
    %117 = vector.load %arg16[%c0_64, %c0_65] : memref<1x128xf32, #tpu.memory_space<vmem>>, vector<1x128xf32>
    %118 = vector.broadcast %117 : vector<1x128xf32> to vector<4x128xf32>
    %119 = arith.addf %116, %118 : vector<4x128xf32>
    %cst_66 = arith.constant 5.000000e-01 : f32
    %120 = vector.broadcast %cst_66 : f32 to vector<4x128xf32>
    %121 = arith.mulf %120, %119 : vector<4x128xf32>
    %cst_67 = arith.constant 0.707106769 : f32
    %122 = vector.broadcast %cst_67 : f32 to vector<4x128xf32>
    %123 = arith.mulf %119, %122 : vector<4x128xf32>
    %124 = math.erf %123 : vector<4x128xf32>
    %cst_68 = arith.constant 1.000000e+00 : f32
    %125 = vector.broadcast %cst_68 : f32 to vector<4x128xf32>
    %126 = arith.addf %125, %124 : vector<4x128xf32>
    %127 = arith.mulf %121, %126 : vector<4x128xf32>
    %128 = arith.truncf %127 : vector<4x128xf32> to vector<4x128xbf16>
    %c0_69 = arith.constant 0 : index
    %c0_70 = arith.constant 0 : index
    %129 = vector.load %arg17[%c0_69, %c0_70] : memref<128x128xbf16, #tpu.memory_space<vmem>>, vector<128x128xbf16>
    %cst_71 = arith.constant dense<0.000000e+00> : vector<4x128xf32>
    %130 = tpu.matmul %128, %129, %cst_71 {dimension_numbers = #tpu.dot_dimension_numbers<[1], [0], [0], [1], [0, 0, 1, 1], [], []>} : vector<4x128xbf16>, vector<128x128xbf16>, vector<4x128xf32> -> vector<4x128xf32>
    %c0_72 = arith.constant 0 : index
    %c0_73 = arith.constant 0 : index
    %131 = vector.load %arg18[%c0_72, %c0_73] : memref<1x128xf32, #tpu.memory_space<vmem>>, vector<1x128xf32>
    %132 = vector.broadcast %131 : vector<1x128xf32> to vector<4x128xf32>
    %133 = arith.addf %130, %132 : vector<4x128xf32>
    %134 = arith.mulf %133, %133 : vector<4x128xf32>
    %cst_74 = arith.constant dense<0.000000e+00> : vector<4xf32>
    %135 = vector.multi_reduction <add>, %134, %cst_74 [1] : vector<4x128xf32> to vector<4xf32>
    %136 = vector.shape_cast %135 : vector<4xf32> to vector<4x1xf32>
    %cst_75 = arith.constant 1.000000e-24 : f32
    %137 = vector.broadcast %cst_75 : f32 to vector<4x1xf32>
    %138 = arith.maximumf %136, %137 : vector<4x1xf32>
    %139 = math.rsqrt %138 : vector<4x1xf32>
    %140 = vector.broadcast %139 : vector<4x1xf32> to vector<4x128xf32>
    %141 = arith.mulf %133, %140 : vector<4x128xf32>
    %142 = arith.truncf %141 : vector<4x128xf32> to vector<4x128xbf16>
    %c0_76 = arith.constant 0 : index
    %c0_77 = arith.constant 0 : index
    %143 = vector.load %arg19[%c0_76, %c0_77] : memref<128x128xbf16, #tpu.memory_space<vmem>>, vector<128x128xbf16>
    %cst_78 = arith.constant dense<0.000000e+00> : vector<4x128xf32>
    %144 = tpu.matmul %142, %143, %cst_78 {dimension_numbers = #tpu.dot_dimension_numbers<[1], [0], [0], [1], [0, 0, 1, 1], [], []>} : vector<4x128xbf16>, vector<128x128xbf16>, vector<4x128xf32> -> vector<4x128xf32>
    %145 = vector.broadcast %91 : vector<1x128xf32> to vector<4x128xf32>
    %146 = arith.subf %82, %145 : vector<4x128xf32>
    %147 = vector.broadcast %109 : vector<1x128xf32> to vector<4x128xf32>
    %148 = arith.mulf %146, %147 : vector<4x128xf32>
    %c0_79 = arith.constant 0 : index
    %c0_80 = arith.constant 0 : index
    %149 = vector.load %arg15[%c0_79, %c0_80] : memref<1x128xf32, #tpu.memory_space<vmem>>, vector<1x128xf32>
    %150 = vector.broadcast %149 : vector<1x128xf32> to vector<4x128xf32>
    %151 = arith.mulf %148, %150 : vector<4x128xf32>
    %c0_81 = arith.constant 0 : index
    %c0_82 = arith.constant 0 : index
    %152 = vector.load %arg16[%c0_81, %c0_82] : memref<1x128xf32, #tpu.memory_space<vmem>>, vector<1x128xf32>
    %153 = vector.broadcast %152 : vector<1x128xf32> to vector<4x128xf32>
    %154 = arith.addf %151, %153 : vector<4x128xf32>
    %cst_83 = arith.constant 5.000000e-01 : f32
    %155 = vector.broadcast %cst_83 : f32 to vector<4x128xf32>
    %156 = arith.mulf %155, %154 : vector<4x128xf32>
    %cst_84 = arith.constant 0.707106769 : f32
    %157 = vector.broadcast %cst_84 : f32 to vector<4x128xf32>
    %158 = arith.mulf %154, %157 : vector<4x128xf32>
    %159 = math.erf %158 : vector<4x128xf32>
    %cst_85 = arith.constant 1.000000e+00 : f32
    %160 = vector.broadcast %cst_85 : f32 to vector<4x128xf32>
    %161 = arith.addf %160, %159 : vector<4x128xf32>
    %162 = arith.mulf %156, %161 : vector<4x128xf32>
    %163 = arith.truncf %162 : vector<4x128xf32> to vector<4x128xbf16>
    %c0_86 = arith.constant 0 : index
    %c0_87 = arith.constant 0 : index
    %164 = vector.load %arg17[%c0_86, %c0_87] : memref<128x128xbf16, #tpu.memory_space<vmem>>, vector<128x128xbf16>
    %cst_88 = arith.constant dense<0.000000e+00> : vector<4x128xf32>
    %165 = tpu.matmul %163, %164, %cst_88 {dimension_numbers = #tpu.dot_dimension_numbers<[1], [0], [0], [1], [0, 0, 1, 1], [], []>} : vector<4x128xbf16>, vector<128x128xbf16>, vector<4x128xf32> -> vector<4x128xf32>
    %c0_89 = arith.constant 0 : index
    %c0_90 = arith.constant 0 : index
    %166 = vector.load %arg18[%c0_89, %c0_90] : memref<1x128xf32, #tpu.memory_space<vmem>>, vector<1x128xf32>
    %167 = vector.broadcast %166 : vector<1x128xf32> to vector<4x128xf32>
    %168 = arith.addf %165, %167 : vector<4x128xf32>
    %169 = arith.mulf %168, %168 : vector<4x128xf32>
    %cst_91 = arith.constant dense<0.000000e+00> : vector<4xf32>
    %170 = vector.multi_reduction <add>, %169, %cst_91 [1] : vector<4x128xf32> to vector<4xf32>
    %171 = vector.shape_cast %170 : vector<4xf32> to vector<4x1xf32>
    %cst_92 = arith.constant 1.000000e-24 : f32
    %172 = vector.broadcast %cst_92 : f32 to vector<4x1xf32>
    %173 = arith.maximumf %171, %172 : vector<4x1xf32>
    %174 = math.rsqrt %173 : vector<4x1xf32>
    %175 = vector.broadcast %174 : vector<4x1xf32> to vector<4x128xf32>
    %176 = arith.mulf %168, %175 : vector<4x128xf32>
    %177 = arith.truncf %176 : vector<4x128xf32> to vector<4x128xbf16>
    %c0_93 = arith.constant 0 : index
    %c0_94 = arith.constant 0 : index
    %178 = vector.load %arg19[%c0_93, %c0_94] : memref<128x128xbf16, #tpu.memory_space<vmem>>, vector<128x128xbf16>
    %cst_95 = arith.constant dense<0.000000e+00> : vector<4x128xf32>
    %179 = tpu.matmul %177, %178, %cst_95 {dimension_numbers = #tpu.dot_dimension_numbers<[1], [0], [0], [1], [0, 0, 1, 1], [], []>} : vector<4x128xbf16>, vector<128x128xbf16>, vector<4x128xf32> -> vector<4x128xf32>
    %180 = vector.extract_strided_slice %70 {offsets = [0, 0], sizes = [4, 128], strides = [1, 1]} : vector<8x128xf32> to vector<4x128xf32>
    %181 = vector.extract_strided_slice %70 {offsets = [4, 0], sizes = [4, 128], strides = [1, 1]} : vector<8x128xf32> to vector<4x128xf32>
    %c0_96 = arith.constant 0 : index
    %c0_97 = arith.constant 0 : index
    %182 = vector.load %arg20[%c0_96, %c0_97] : memref<1x128xf32, #tpu.memory_space<vmem>>, vector<1x128xf32>
    %183 = tpu.iota {dimensions = array<i32: 1>} : vector<1x128xi32>
    %c128_i32 = arith.constant 128 : i32
    %184 = vector.broadcast %c128_i32 : i32 to vector<1x128xi32>
    %185 = arith.cmpi slt, %183, %184 : vector<1x128xi32>
    %cst_98 = arith.constant 1.000000e+01 : f32
    %186 = vector.broadcast %cst_98 : f32 to vector<4x128xf32>
    %187 = arith.mulf %180, %186 : vector<4x128xf32>
    %cst_99 = arith.constant -1.000000e+30 : f32
    %188 = vector.shape_cast %185 : vector<1x128xi1> to vector<1x128xi1>
    %189 = vector.broadcast %188 : vector<1x128xi1> to vector<4x128xi1>
    %190 = vector.broadcast %cst_99 : f32 to vector<4x128xf32>
    %191 = arith.select %189, %187, %190 : vector<4x128xi1>, vector<4x128xf32>
    %192 = vector.broadcast %182 : vector<1x128xf32> to vector<4x128xf32>
    %193 = arith.subf %179, %192 : vector<4x128xf32>
    %cst_100 = arith.constant 2.500000e+01 : f32
    %194 = vector.broadcast %cst_100 : f32 to vector<4x128xf32>
    %195 = arith.mulf %193, %194 : vector<4x128xf32>
    %cst_101 = arith.constant -1.000000e+30 : f32
    %196 = vector.shape_cast %185 : vector<1x128xi1> to vector<1x128xi1>
    %197 = vector.broadcast %196 : vector<1x128xi1> to vector<4x128xi1>
    %198 = vector.broadcast %cst_101 : f32 to vector<4x128xf32>
    %199 = arith.select %197, %195, %198 : vector<4x128xi1>, vector<4x128xf32>
    %cst_102 = arith.constant dense<0xFF800000> : vector<4xf32>
    %200 = vector.multi_reduction <maximumf>, %199, %cst_102 [1] : vector<4x128xf32> to vector<4xf32>
    %201 = vector.shape_cast %200 : vector<4xf32> to vector<4x1xf32>
    %202 = vector.broadcast %201 : vector<4x1xf32> to vector<4x128xf32>
    %203 = arith.subf %199, %202 : vector<4x128xf32>
    %204 = math.exp %203 : vector<4x128xf32>
    %cst_103 = arith.constant dense<0.000000e+00> : vector<4xf32>
    %205 = vector.multi_reduction <add>, %204, %cst_103 [1] : vector<4x128xf32> to vector<4xf32>
    %206 = vector.shape_cast %205 : vector<4xf32> to vector<4x1xf32>
    %207 = tpu.reciprocal %206 {approx = true} : vector<4x1xf32> -> vector<4x1xf32>
    %208 = vector.broadcast %207 : vector<4x1xf32> to vector<4x128xf32>
    %209 = arith.mulf %204, %208 : vector<4x128xf32>
    %210 = vector.broadcast %201 : vector<4x1xf32> to vector<4x128xf32>
    %211 = arith.subf %199, %210 : vector<4x128xf32>
    %212 = math.log %206 : vector<4x1xf32>
    %213 = vector.broadcast %212 : vector<4x1xf32> to vector<4x128xf32>
    %214 = arith.subf %211, %213 : vector<4x128xf32>
    %cst_104 = arith.constant dense<0xFF800000> : vector<4xf32>
    %215 = vector.multi_reduction <maximumf>, %191, %cst_104 [1] : vector<4x128xf32> to vector<4xf32>
    %216 = vector.shape_cast %215 : vector<4xf32> to vector<4x1xf32>
    %217 = vector.broadcast %216 : vector<4x1xf32> to vector<4x128xf32>
    %218 = arith.subf %191, %217 : vector<4x128xf32>
    %219 = math.exp %218 : vector<4x128xf32>
    %cst_105 = arith.constant dense<0.000000e+00> : vector<4xf32>
    %220 = vector.multi_reduction <add>, %219, %cst_105 [1] : vector<4x128xf32> to vector<4xf32>
    %221 = vector.shape_cast %220 : vector<4xf32> to vector<4x1xf32>
    %222 = math.log %221 : vector<4x1xf32>
    %223 = arith.addf %222, %216 : vector<4x1xf32>
    %224 = vector.broadcast %223 : vector<4x1xf32> to vector<4x128xf32>
    %225 = arith.subf %191, %224 : vector<4x128xf32>
    %226 = arith.mulf %209, %225 : vector<4x128xf32>
    %cst_106 = arith.constant dense<0.000000e+00> : vector<4xf32>
    %227 = vector.multi_reduction <add>, %226, %cst_106 [1] : vector<4x128xf32> to vector<4xf32>
    %228 = vector.shape_cast %227 : vector<4xf32> to vector<4x1xf32>
    %cst_107 = arith.constant dense<0.000000e+00> : vector<1xf32>
    %229 = vector.multi_reduction <add>, %228, %cst_107 [0] : vector<4x1xf32> to vector<1xf32>
    %230 = vector.shape_cast %229 : vector<1xf32> to vector<1x1xf32>
    %cst_108 = arith.constant 4.000000e+00 : f32
    %231 = vector.broadcast %cst_108 : f32 to vector<1x1xf32>
    %232 = arith.divf %230, %231 : vector<1x1xf32>
    %cst_109 = arith.constant 0.000000e+00 : f32
    %233 = vector.broadcast %cst_109 : f32 to vector<1x1xf32>
    %234 = arith.subf %233, %232 : vector<1x1xf32>
    %235 = arith.mulf %209, %214 : vector<4x128xf32>
    %cst_110 = arith.constant dense<0.000000e+00> : vector<4xf32>
    %236 = vector.multi_reduction <add>, %235, %cst_110 [1] : vector<4x128xf32> to vector<4xf32>
    %237 = vector.shape_cast %236 : vector<4xf32> to vector<4x1xf32>
    %cst_111 = arith.constant dense<0.000000e+00> : vector<1xf32>
    %238 = vector.multi_reduction <add>, %237, %cst_111 [0] : vector<4x1xf32> to vector<1xf32>
    %239 = vector.shape_cast %238 : vector<1xf32> to vector<1x1xf32>
    %cst_112 = arith.constant 4.000000e+00 : f32
    %240 = vector.broadcast %cst_112 : f32 to vector<1x1xf32>
    %241 = arith.divf %239, %240 : vector<1x1xf32>
    %cst_113 = arith.constant 0.000000e+00 : f32
    %242 = vector.broadcast %cst_113 : f32 to vector<1x1xf32>
    %243 = arith.subf %242, %241 : vector<1x1xf32>
    %cst_114 = arith.constant dense<0.000000e+00> : vector<128xf32>
    %244 = vector.multi_reduction <add>, %179, %cst_114 [0] : vector<4x128xf32> to vector<128xf32>
    %245 = vector.shape_cast %244 : vector<128xf32> to vector<1x128xf32>
    %cst_115 = arith.constant 4.000000e+00 : f32
    %246 = vector.broadcast %cst_115 : f32 to vector<1x128xf32>
    %247 = arith.divf %245, %246 : vector<1x128xf32>
    %cst_116 = arith.constant 0.899999976 : f32
    %248 = vector.broadcast %cst_116 : f32 to vector<1x128xf32>
    %249 = arith.mulf %182, %248 : vector<1x128xf32>
    %cst_117 = arith.constant 1.000000e-01 : f32
    %250 = vector.broadcast %cst_117 : f32 to vector<1x128xf32>
    %251 = arith.mulf %247, %250 : vector<1x128xf32>
    %252 = arith.addf %249, %251 : vector<1x128xf32>
    %cst_118 = arith.constant 1.000000e+01 : f32
    %253 = vector.broadcast %cst_118 : f32 to vector<4x128xf32>
    %254 = arith.mulf %181, %253 : vector<4x128xf32>
    %cst_119 = arith.constant -1.000000e+30 : f32
    %255 = vector.shape_cast %185 : vector<1x128xi1> to vector<1x128xi1>
    %256 = vector.broadcast %255 : vector<1x128xi1> to vector<4x128xi1>
    %257 = vector.broadcast %cst_119 : f32 to vector<4x128xf32>
    %258 = arith.select %256, %254, %257 : vector<4x128xi1>, vector<4x128xf32>
    %259 = vector.broadcast %252 : vector<1x128xf32> to vector<4x128xf32>
    %260 = arith.subf %144, %259 : vector<4x128xf32>
    %cst_120 = arith.constant 2.500000e+01 : f32
    %261 = vector.broadcast %cst_120 : f32 to vector<4x128xf32>
    %262 = arith.mulf %260, %261 : vector<4x128xf32>
    %cst_121 = arith.constant -1.000000e+30 : f32
    %263 = vector.shape_cast %185 : vector<1x128xi1> to vector<1x128xi1>
    %264 = vector.broadcast %263 : vector<1x128xi1> to vector<4x128xi1>
    %265 = vector.broadcast %cst_121 : f32 to vector<4x128xf32>
    %266 = arith.select %264, %262, %265 : vector<4x128xi1>, vector<4x128xf32>
    %cst_122 = arith.constant dense<0xFF800000> : vector<4xf32>
    %267 = vector.multi_reduction <maximumf>, %266, %cst_122 [1] : vector<4x128xf32> to vector<4xf32>
    %268 = vector.shape_cast %267 : vector<4xf32> to vector<4x1xf32>
    %269 = vector.broadcast %268 : vector<4x1xf32> to vector<4x128xf32>
    %270 = arith.subf %266, %269 : vector<4x128xf32>
    %271 = math.exp %270 : vector<4x128xf32>
    %cst_123 = arith.constant dense<0.000000e+00> : vector<4xf32>
    %272 = vector.multi_reduction <add>, %271, %cst_123 [1] : vector<4x128xf32> to vector<4xf32>
    %273 = vector.shape_cast %272 : vector<4xf32> to vector<4x1xf32>
    %274 = tpu.reciprocal %273 {approx = true} : vector<4x1xf32> -> vector<4x1xf32>
    %275 = vector.broadcast %274 : vector<4x1xf32> to vector<4x128xf32>
    %276 = arith.mulf %271, %275 : vector<4x128xf32>
    %277 = vector.broadcast %268 : vector<4x1xf32> to vector<4x128xf32>
    %278 = arith.subf %266, %277 : vector<4x128xf32>
    %279 = math.log %273 : vector<4x1xf32>
    %280 = vector.broadcast %279 : vector<4x1xf32> to vector<4x128xf32>
    %281 = arith.subf %278, %280 : vector<4x128xf32>
    %cst_124 = arith.constant dense<0xFF800000> : vector<4xf32>
    %282 = vector.multi_reduction <maximumf>, %258, %cst_124 [1] : vector<4x128xf32> to vector<4xf32>
    %283 = vector.shape_cast %282 : vector<4xf32> to vector<4x1xf32>
    %284 = vector.broadcast %283 : vector<4x1xf32> to vector<4x128xf32>
    %285 = arith.subf %258, %284 : vector<4x128xf32>
    %286 = math.exp %285 : vector<4x128xf32>
    %cst_125 = arith.constant dense<0.000000e+00> : vector<4xf32>
    %287 = vector.multi_reduction <add>, %286, %cst_125 [1] : vector<4x128xf32> to vector<4xf32>
    %288 = vector.shape_cast %287 : vector<4xf32> to vector<4x1xf32>
    %289 = math.log %288 : vector<4x1xf32>
    %290 = arith.addf %289, %283 : vector<4x1xf32>
    %291 = vector.broadcast %290 : vector<4x1xf32> to vector<4x128xf32>
    %292 = arith.subf %258, %291 : vector<4x128xf32>
    %293 = arith.mulf %276, %292 : vector<4x128xf32>
    %cst_126 = arith.constant dense<0.000000e+00> : vector<4xf32>
    %294 = vector.multi_reduction <add>, %293, %cst_126 [1] : vector<4x128xf32> to vector<4xf32>
    %295 = vector.shape_cast %294 : vector<4xf32> to vector<4x1xf32>
    %cst_127 = arith.constant dense<0.000000e+00> : vector<1xf32>
    %296 = vector.multi_reduction <add>, %295, %cst_127 [0] : vector<4x1xf32> to vector<1xf32>
    %297 = vector.shape_cast %296 : vector<1xf32> to vector<1x1xf32>
    %cst_128 = arith.constant 4.000000e+00 : f32
    %298 = vector.broadcast %cst_128 : f32 to vector<1x1xf32>
    %299 = arith.divf %297, %298 : vector<1x1xf32>
    %cst_129 = arith.constant 0.000000e+00 : f32
    %300 = vector.broadcast %cst_129 : f32 to vector<1x1xf32>
    %301 = arith.subf %300, %299 : vector<1x1xf32>
    %302 = arith.mulf %276, %281 : vector<4x128xf32>
    %cst_130 = arith.constant dense<0.000000e+00> : vector<4xf32>
    %303 = vector.multi_reduction <add>, %302, %cst_130 [1] : vector<4x128xf32> to vector<4xf32>
    %304 = vector.shape_cast %303 : vector<4xf32> to vector<4x1xf32>
    %cst_131 = arith.constant dense<0.000000e+00> : vector<1xf32>
    %305 = vector.multi_reduction <add>, %304, %cst_131 [0] : vector<4x1xf32> to vector<1xf32>
    %306 = vector.shape_cast %305 : vector<1xf32> to vector<1x1xf32>
    %cst_132 = arith.constant 4.000000e+00 : f32
    %307 = vector.broadcast %cst_132 : f32 to vector<1x1xf32>
    %308 = arith.divf %306, %307 : vector<1x1xf32>
    %cst_133 = arith.constant 0.000000e+00 : f32
    %309 = vector.broadcast %cst_133 : f32 to vector<1x1xf32>
    %310 = arith.subf %309, %308 : vector<1x1xf32>
    %cst_134 = arith.constant dense<0.000000e+00> : vector<128xf32>
    %311 = vector.multi_reduction <add>, %144, %cst_134 [0] : vector<4x128xf32> to vector<128xf32>
    %312 = vector.shape_cast %311 : vector<128xf32> to vector<1x128xf32>
    %cst_135 = arith.constant 4.000000e+00 : f32
    %313 = vector.broadcast %cst_135 : f32 to vector<1x128xf32>
    %314 = arith.divf %312, %313 : vector<1x128xf32>
    %cst_136 = arith.constant 0.899999976 : f32
    %315 = vector.broadcast %cst_136 : f32 to vector<1x128xf32>
    %316 = arith.mulf %252, %315 : vector<1x128xf32>
    %cst_137 = arith.constant 1.000000e-01 : f32
    %317 = vector.broadcast %cst_137 : f32 to vector<1x128xf32>
    %318 = arith.mulf %314, %317 : vector<1x128xf32>
    %319 = arith.addf %316, %318 : vector<1x128xf32>
    %320 = arith.addf %234, %301 : vector<1x1xf32>
    %cst_138 = arith.constant 5.000000e-01 : f32
    %321 = vector.broadcast %cst_138 : f32 to vector<1x1xf32>
    %322 = arith.mulf %320, %321 : vector<1x1xf32>
    %323 = arith.addf %243, %310 : vector<1x1xf32>
    %cst_139 = arith.constant 5.000000e-01 : f32
    %324 = vector.broadcast %cst_139 : f32 to vector<1x1xf32>
    %325 = arith.mulf %323, %324 : vector<1x1xf32>
    %326 = tpu.iota {dimensions = array<i32: 1>} : vector<1x128xi32>
    %c0_i32 = arith.constant 0 : i32
    %327 = vector.broadcast %c0_i32 : i32 to vector<1x128xi32>
    %328 = arith.cmpi eq, %326, %327 : vector<1x128xi32>
    %cst_140 = arith.constant 0.000000e+00 : f32
    %329 = vector.shape_cast %322 : vector<1x1xf32> to vector<1x1xf32>
    %330 = vector.broadcast %329 : vector<1x1xf32> to vector<1x128xf32>
    %331 = vector.broadcast %cst_140 : f32 to vector<1x128xf32>
    %332 = arith.select %328, %330, %331 : vector<1x128xi1>, vector<1x128xf32>
    %c1_i32 = arith.constant 1 : i32
    %333 = vector.broadcast %c1_i32 : i32 to vector<1x128xi32>
    %334 = arith.cmpi eq, %326, %333 : vector<1x128xi32>
    %cst_141 = arith.constant 0.000000e+00 : f32
    %335 = vector.shape_cast %325 : vector<1x1xf32> to vector<1x1xf32>
    %336 = vector.broadcast %335 : vector<1x1xf32> to vector<1x128xf32>
    %337 = vector.broadcast %cst_141 : f32 to vector<1x128xf32>
    %338 = arith.select %334, %336, %337 : vector<1x128xi1>, vector<1x128xf32>
    %339 = arith.addf %332, %338 : vector<1x128xf32>
    %c0_142 = arith.constant 0 : index
    %c0_143 = arith.constant 0 : index
    %340 = vector.load %arg21[%c0_142, %c0_143] : memref<1x128xf32, #tpu.memory_space<vmem>>, vector<1x128xf32>
    tpu.vector_store %arg21[%c0_142, %c0_143], %339 {strides = array<i32>} : memref<1x128xf32, #tpu.memory_space<vmem>>, vector<1x128xf32>,
    %c0_144 = arith.constant 0 : index
    %c0_145 = arith.constant 0 : index
    %341 = vector.load %arg22[%c0_144, %c0_145] : memref<1x128xf32, #tpu.memory_space<vmem>>, vector<1x128xf32>
    tpu.vector_store %arg22[%c0_144, %c0_145], %319 {strides = array<i32>} : memref<1x128xf32, #tpu.memory_space<vmem>>, vector<1x128xf32>,
    return
  }
  func.func @transform_0(%arg0: i32) -> (i32, i32) {
    %c0_i32 = arith.constant 0 : i32
    %c0_i32_0 = arith.constant 0 : i32
    %c0_i32_1 = arith.constant 0 : i32
    return %c0_i32, %c0_i32_0 : i32, i32
  }
  func.func @transform_1(%arg0: i32) -> (i32, i32) {
    %c0_i32 = arith.constant 0 : i32
    %c0_i32_0 = arith.constant 0 : i32
    %c0_i32_1 = arith.constant 0 : i32
    return %c0_i32, %c0_i32_0 : i32, i32
  }
  func.func @transform_2(%arg0: i32) -> (i32, i32) {
    %c0_i32 = arith.constant 0 : i32
    %c0_i32_0 = arith.constant 0 : i32
    %c0_i32_1 = arith.constant 0 : i32
    return %c0_i32, %c0_i32_0 : i32, i32
  }
  func.func @transform_3(%arg0: i32) -> (i32, i32) {
    %c0_i32 = arith.constant 0 : i32
    %c0_i32_0 = arith.constant 0 : i32
    %c0_i32_1 = arith.constant 0 : i32
    return %c0_i32, %c0_i32_0 : i32, i32
  }
  func.func @transform_4(%arg0: i32) -> (i32, i32) {
    %c0_i32 = arith.constant 0 : i32
    %c0_i32_0 = arith.constant 0 : i32
    %c0_i32_1 = arith.constant 0 : i32
    return %c0_i32, %c0_i32_0 : i32, i32
  }
  func.func @transform_5(%arg0: i32) -> (i32, i32) {
    %c0_i32 = arith.constant 0 : i32
    %c0_i32_0 = arith.constant 0 : i32
    %c0_i32_1 = arith.constant 0 : i32
    return %c0_i32, %c0_i32_0 : i32, i32
  }
  func.func @transform_6(%arg0: i32) -> (i32, i32) {
    %c0_i32 = arith.constant 0 : i32
    %c0_i32_0 = arith.constant 0 : i32
    %c0_i32_1 = arith.constant 0 : i32
    return %c0_i32, %c0_i32_0 : i32, i32
  }
  func.func @transform_7(%arg0: i32) -> (i32, i32) {
    %c0_i32 = arith.constant 0 : i32
    %c0_i32_0 = arith.constant 0 : i32
    %c0_i32_1 = arith.constant 0 : i32
    return %c0_i32, %c0_i32_0 : i32, i32
  }
  func.func @transform_8(%arg0: i32) -> (i32, i32) {
    %c0_i32 = arith.constant 0 : i32
    %c0_i32_0 = arith.constant 0 : i32
    %c0_i32_1 = arith.constant 0 : i32
    return %c0_i32, %c0_i32_0 : i32, i32
  }
  func.func @transform_9(%arg0: i32) -> (i32, i32) {
    %c0_i32 = arith.constant 0 : i32
    %c0_i32_0 = arith.constant 0 : i32
    %c0_i32_1 = arith.constant 0 : i32
    return %c0_i32, %c0_i32_0 : i32, i32
  }
  func.func @transform_10(%arg0: i32) -> (i32, i32) {
    %c0_i32 = arith.constant 0 : i32
    %c0_i32_0 = arith.constant 0 : i32
    %c0_i32_1 = arith.constant 0 : i32
    return %c0_i32, %c0_i32_0 : i32, i32
  }
  func.func @transform_11(%arg0: i32) -> (i32, i32) {
    %c0_i32 = arith.constant 0 : i32
    %c0_i32_0 = arith.constant 0 : i32
    %c0_i32_1 = arith.constant 0 : i32
    return %c0_i32, %c0_i32_0 : i32, i32
  }
  func.func @transform_12(%arg0: i32) -> (i32, i32) {
    %c0_i32 = arith.constant 0 : i32
    %c0_i32_0 = arith.constant 0 : i32
    %c0_i32_1 = arith.constant 0 : i32
    return %c0_i32, %c0_i32_0 : i32, i32
  }
  func.func @transform_13(%arg0: i32) -> (i32, i32) {
    %c0_i32 = arith.constant 0 : i32
    %c0_i32_0 = arith.constant 0 : i32
    %c0_i32_1 = arith.constant 0 : i32
    return %c0_i32, %c0_i32_0 : i32, i32
  }
  func.func @transform_14(%arg0: i32) -> (i32, i32) {
    %c0_i32 = arith.constant 0 : i32
    %c0_i32_0 = arith.constant 0 : i32
    %c0_i32_1 = arith.constant 0 : i32
    return %c0_i32, %c0_i32_0 : i32, i32
  }
  func.func @transform_15(%arg0: i32) -> (i32, i32) {
    %c0_i32 = arith.constant 0 : i32
    %c0_i32_0 = arith.constant 0 : i32
    %c0_i32_1 = arith.constant 0 : i32
    return %c0_i32, %c0_i32_0 : i32, i32
  }
  func.func @transform_16(%arg0: i32) -> (i32, i32) {
    %c0_i32 = arith.constant 0 : i32
    %c0_i32_0 = arith.constant 0 : i32
    %c0_i32_1 = arith.constant 0 : i32
    return %c0_i32, %c0_i32_0 : i32, i32
  }
  func.func @transform_17(%arg0: i32) -> (i32, i32) {
    %c0_i32 = arith.constant 0 : i32
    %c0_i32_0 = arith.constant 0 : i32
    %c0_i32_1 = arith.constant 0 : i32
    return %c0_i32, %c0_i32_0 : i32, i32
  }
  func.func @transform_18(%arg0: i32) -> (i32, i32) {
    %c0_i32 = arith.constant 0 : i32
    %c0_i32_0 = arith.constant 0 : i32
    %c0_i32_1 = arith.constant 0 : i32
    return %c0_i32, %c0_i32_0 : i32, i32
  }
  func.func @transform_19(%arg0: i32) -> (i32, i32) {
    %c0_i32 = arith.constant 0 : i32
    %c0_i32_0 = arith.constant 0 : i32
    %c0_i32_1 = arith.constant 0 : i32
    return %c0_i32, %c0_i32_0 : i32, i32
  }
  func.func @transform_20(%arg0: i32) -> (i32, i32) {
    %c0_i32 = arith.constant 0 : i32
    %c0_i32_0 = arith.constant 0 : i32
    %c0_i32_1 = arith.constant 0 : i32
    return %c0_i32, %c0_i32_0 : i32, i32
  }
  func.func @transform_21(%arg0: i32) -> (i32, i32) {
    %c0_i32 = arith.constant 0 : i32
    %c0_i32_0 = arith.constant 0 : i32
    %c0_i32_1 = arith.constant 0 : i32
    return %c0_i32, %c0_i32_0 : i32, i32
  }
}

</mosaic_0001>

<llo_original>
// kernel: tpu_custom_call.1
$region0: #{tpu_custom_call.1}
  #allocation0 [shape = 'u32[]', space=smem, size = 0x4, offset = 0x4, fixed_abs, tag = 'smem constant byte address 0x4 - core index']
  #allocation1 [shape = 'u32[144,128]{1,0:T(1,128)}', space=vmem, size = 0x12000, scoped, tag = 'internal scratch']
  %s0 = inlined_call_operand.vmem [shape: bf16[4,256], index: 0, kind: input, shape index: {}]
  %s1 = inlined_call_operand.vmem [shape: bf16[4,256], index: 1, kind: input, shape index: {}]
  %s2 = inlined_call_operand.vmem [shape: bf16[8,128], index: 2, kind: input, shape index: {}]
  %s3 = inlined_call_operand.hbm [shape: bf16[256,128], index: 3, kind: input, shape index: {}]
  %s4 = inlined_call_operand.vmem [shape: f32[1,128], index: 4, kind: input, shape index: {}]
  %s5 = inlined_call_operand.hbm [shape: bf16[128,128], index: 5, kind: input, shape index: {}]
  %s6 = inlined_call_operand.vmem [shape: f32[1,128], index: 6, kind: input, shape index: {}]
  %s7 = inlined_call_operand.vmem [shape: f32[1,128], index: 7, kind: input, shape index: {}]
  %s8 = inlined_call_operand.vmem [shape: f32[1,128], index: 8, kind: input, shape index: {}]
  %s9 = inlined_call_operand.hbm [shape: bf16[128,128], index: 9, kind: input, shape index: {}]
  %s10 = inlined_call_operand.vmem [shape: f32[1,128], index: 10, kind: input, shape index: {}]
  %s11 = inlined_call_operand.hbm [shape: bf16[128,128], index: 11, kind: input, shape index: {}]
  %s12 = inlined_call_operand.hbm [shape: bf16[128,128], index: 12, kind: input, shape index: {}]
  %s13 = inlined_call_operand.vmem [shape: f32[1,128], index: 13, kind: input, shape index: {}]
  %s14 = inlined_call_operand.vmem [shape: f32[1,128], index: 14, kind: input, shape index: {}]
  %s15 = inlined_call_operand.hbm [shape: f32[1,128], index: 15, kind: input, shape index: {}]
  %s16 = inlined_call_operand.hbm [shape: bf16[128,128], index: 16, kind: input, shape index: {}]
  %s17 = inlined_call_operand.hbm [shape: f32[1,128], index: 17, kind: input, shape index: {}]
  %s18 = inlined_call_operand.hbm [shape: bf16[128,128], index: 18, kind: input, shape index: {}]
  %s19 = inlined_call_operand.hbm [shape: f32[1,128], index: 19, kind: input, shape index: {}, may-alias: {19,21}]
  %s20 = inlined_call_operand.hbm [shape: f32[1,128], index: 20, kind: output, shape index: {0}]
  %s21 = inlined_call_operand.hbm [shape: f32[1,128], index: 21, kind: output, shape index: {1}, may-alias: {19,21}]
  %22 = xla_tuple %s20, %s21
  %s23 = sld [smem:[#allocation0]]
  $region138: #{tpu_custom_call.1} parent=0
    _
  %s25 = ssub.s32 1, %s23
  %s26 = scalar_select 0, %s25, %s23
  $region1: #{tpu_custom_call.1} parent=0
    #allocation2 [shape = 'u8[65536]{0}', space=vmem, size = 0x10000, scoped, tag = 'input window, operand 3, single buffered']
    #allocation3 [shape = 's32[1]{0}', space=sflag, size = 0x4, scoped, tag = 'scoped memory for tpu_custom_call.1']
    #allocation4 [shape = 's32[1]{0}', space=sflag, size = 0x4, scoped, tag = 'scoped memory for tpu_custom_call.1']
    #allocation5 [shape = 'u8[32768]{0}', space=vmem, size = 0x8000, scoped, tag = 'input window, operand 5, single buffered']
    #allocation6 [shape = 's32[1]{0}', space=sflag, size = 0x4, scoped, tag = 'scoped memory for tpu_custom_call.1']
    #allocation7 [shape = 'u8[32768]{0}', space=vmem, size = 0x8000, scoped, tag = 'input window, operand 9, single buffered']
    #allocation8 [shape = 'u8[32768]{0}', space=vmem, size = 0x8000, scoped, tag = 'input window, operand 11, single buffered']
    #allocation9 [shape = 's32[1]{0}', space=sflag, size = 0x4, scoped, tag = 'scoped memory for tpu_custom_call.1']
    #allocation10 [shape = 'u8[32768]{0}', space=vmem, size = 0x8000, scoped, tag = 'input window, operand 12, single buffered']
    #allocation11 [shape = 'u8[512]{0}', space=vmem, size = 0x400, scoped, tag = 'input window, operand 15, single buffered']
    #allocation12 [shape = 's32[1]{0}', space=sflag, size = 0x4, scoped, tag = 'scoped memory for tpu_custom_call.1']
    #allocation13 [shape = 'u8[32768]{0}', space=vmem, size = 0x8000, scoped, tag = 'input window, operand 16, single buffered']
    #allocation14 [shape = 'u8[512]{0}', space=vmem, size = 0x400, scoped, tag = 'input window, operand 17, single buffered']
    #allocation15 [shape = 's32[1]{0}', space=sflag, size = 0x4, scoped, tag = 'scoped memory for tpu_custom_call.1']
    #allocation16 [shape = 'u8[32768]{0}', space=vmem, size = 0x8000, scoped, tag = 'input window, operand 18, single buffered']
    #allocation17 [shape = 'u8[512]{0}', space=vmem, size = 0x400, scoped, tag = 'input window, operand 19, single buffered']
    #allocation18 [shape = 's32[1]{0}', space=sflag, size = 0x4, scoped, tag = 'scoped memory for tpu_custom_call.1']
    #allocation19 [shape = 'u8[512]{0}', space=vmem, size = 0x400, scoped, tag = 'output window, operand 0, single buffered']
    #allocation20 [shape = 'u8[512]{0}', space=vmem, size = 0x400, scoped, tag = 'output window, operand 1, single buffered']
    #allocation21 [shape = 's32[1]{0}', space=sflag, size = 0x4, scoped, tag = 'scoped memory for tpu_custom_call.1']
    %27 = vsyncpa [#allocation3], 0
    %28 = vsyncpa [#allocation6], 0
    %29 = vsyncpa [#allocation9], 0
    %30 = vsyncpa [#allocation12], 0
    %31 = vsyncpa [#allocation15], 0
    %32 = vsyncpa [#allocation18], 0
    %33 = vsyncpa [#allocation4], 0
    %34 = vsyncpa [#allocation21], 0
    // Predicated region
    $region2: #{tpu_custom_call.1} parent=1 // pred_check
      _
    $region3: #{tpu_custom_call.1} parent=1 // pred_check_branch
      %36 = sbr.rel (0) target = $region5
    $region4: #{tpu_custom_call.1} parent=1 // pred_region
      _
    $region5: #{tpu_custom_call.1} parent=1 // pred_fallthru
      _
    // Predicated region
    $region6: #{tpu_custom_call.1} parent=1 // pred_check
      _
    $region7: #{tpu_custom_call.1} parent=1 // pred_check_branch
      %38 = sbr.rel (0) target = $region9
    $region8: #{tpu_custom_call.1} parent=1 // pred_region
      _
    $region9: #{tpu_custom_call.1} parent=1 // pred_fallthru
      _
    // Predicated region
    $region10: #{tpu_custom_call.1} parent=1 // pred_check
      _
    $region11: #{tpu_custom_call.1} parent=1 // pred_check_branch
      %40 = sbr.rel (0) target = $region13
    $region12: #{tpu_custom_call.1} parent=1 // pred_region
      _
    $region13: #{tpu_custom_call.1} parent=1 // pred_fallthru
      _
    // Predicated region
    $region14: #{tpu_custom_call.1} parent=1 // pred_check
      _
    $region15: #{tpu_custom_call.1} parent=1 // pred_check_branch
      %42 = sbr.rel (0) target = $region17
    $region16: #{tpu_custom_call.1} parent=1 // pred_region
      %s44 = ssub.s32 2048, 2048
      %45 = vsyncadd [#allocation3], %s44
      %s46 = sshll.u32 [#allocation2], 4
      %s47 = int_to_ptr.vmem [resolvable:$true] %s46
      %52 = dma.hbm_to_vmem [thread:$0]  %s3, 2048, %s47, [#allocation3], 64, 64, 4
    $region17: #{tpu_custom_call.1} parent=1 // pred_fallthru
      _
    // Predicated region
    $region18: #{tpu_custom_call.1} parent=1 // pred_check
      _
    $region19: #{tpu_custom_call.1} parent=1 // pred_check_branch
      %54 = sbr.rel (0) target = $region21
    $region20: #{tpu_custom_call.1} parent=1 // pred_region
      _
    $region21: #{tpu_custom_call.1} parent=1 // pred_fallthru
      _
    // Predicated region
    $region22: #{tpu_custom_call.1} parent=1 // pred_check
      _
    $region23: #{tpu_custom_call.1} parent=1 // pred_check_branch
      %56 = sbr.rel (0) target = $region25
    $region24: #{tpu_custom_call.1} parent=1 // pred_region
      %s58 = ssub.s32 1024, 1024
      %59 = vsyncadd [#allocation6], %s58
      %s60 = sshll.u32 [#allocation5], 4
      %s61 = int_to_ptr.vmem [resolvable:$true] %s60
      %66 = dma.hbm_to_vmem [thread:$0]  %s5, 1024, %s61, [#allocation6], 64, 64, 4
    $region25: #{tpu_custom_call.1} parent=1 // pred_fallthru
      _
    // Predicated region
    $region26: #{tpu_custom_call.1} parent=1 // pred_check
      _
    $region27: #{tpu_custom_call.1} parent=1 // pred_check_branch
      %68 = sbr.rel (0) target = $region29
    $region28: #{tpu_custom_call.1} parent=1 // pred_region
      _
    $region29: #{tpu_custom_call.1} parent=1 // pred_fallthru
      _
    // Predicated region
    $region30: #{tpu_custom_call.1} parent=1 // pred_check
      _
    $region31: #{tpu_custom_call.1} parent=1 // pred_check_branch
      %70 = sbr.rel (0) target = $region33
    $region32: #{tpu_custom_call.1} parent=1 // pred_region
      _
    $region33: #{tpu_custom_call.1} parent=1 // pred_fallthru
      _
    // Predicated region
    $region34: #{tpu_custom_call.1} parent=1 // pred_check
      _
    $region35: #{tpu_custom_call.1} parent=1 // pred_check_branch
      %72 = sbr.rel (0) target = $region37
    $region36: #{tpu_custom_call.1} parent=1 // pred_region
      _
    $region37: #{tpu_custom_call.1} parent=1 // pred_fallthru
      _
    // Predicated region
    $region38: #{tpu_custom_call.1} parent=1 // pred_check
      _
    $region39: #{tpu_custom_call.1} parent=1 // pred_check_branch
      %74 = sbr.rel (0) target = $region41
    $region40: #{tpu_custom_call.1} parent=1 // pred_region
      %s76 = ssub.s32 1024, 1024
      %77 = vsyncadd [#allocation6], %s76
      %s78 = sshll.u32 [#allocation7], 4
      %s79 = int_to_ptr.vmem [resolvable:$true] %s78
      %84 = dma.hbm_to_vmem [thread:$0]  %s9, 1024, %s79, [#allocation6], 64, 64, 4
    $region41: #{tpu_custom_call.1} parent=1 // pred_fallthru
      _
    // Predicated region
    $region42: #{tpu_custom_call.1} parent=1 // pred_check
      _
    $region43: #{tpu_custom_call.1} parent=1 // pred_check_branch
      %86 = sbr.rel (0) target = $region45
    $region44: #{tpu_custom_call.1} parent=1 // pred_region
      _
    $region45: #{tpu_custom_call.1} parent=1 // pred_fallthru
      _
    // Predicated region
    $region46: #{tpu_custom_call.1} parent=1 // pred_check
      _
    $region47: #{tpu_custom_call.1} parent=1 // pred_check_branch
      %88 = sbr.rel (0) target = $region49
    $region48: #{tpu_custom_call.1} parent=1 // pred_region
      %s90 = ssub.s32 1024, 1024
      %91 = vsyncadd [#allocation9], %s90
      %s92 = sshll.u32 [#allocation8], 4
      %s93 = int_to_ptr.vmem [resolvable:$true] %s92
      %98 = dma.hbm_to_vmem [thread:$0]  %s11, 1024, %s93, [#allocation9], 64, 64, 4
    $region49: #{tpu_custom_call.1} parent=1 // pred_fallthru
      _
    // Predicated region
    $region50: #{tpu_custom_call.1} parent=1 // pred_check
      _
    $region51: #{tpu_custom_call.1} parent=1 // pred_check_branch
      %100 = sbr.rel (0) target = $region53
    $region52: #{tpu_custom_call.1} parent=1 // pred_region
      %s102 = ssub.s32 1024, 1024
      %103 = vsyncadd [#allocation9], %s102
      %s104 = sshll.u32 [#allocation10], 4
      %s105 = int_to_ptr.vmem [resolvable:$true] %s104
      %110 = dma.hbm_to_vmem [thread:$0]  %s12, 1024, %s105, [#allocation9], 64, 64, 4
    $region53: #{tpu_custom_call.1} parent=1 // pred_fallthru
      _
    // Predicated region
    $region54: #{tpu_custom_call.1} parent=1 // pred_check
      _
    $region55: #{tpu_custom_call.1} parent=1 // pred_check_branch
      %112 = sbr.rel (0) target = $region57
    $region56: #{tpu_custom_call.1} parent=1 // pred_region
      _
    $region57: #{tpu_custom_call.1} parent=1 // pred_fallthru
      _
    // Predicated region
    $region58: #{tpu_custom_call.1} parent=1 // pred_check
      _
    $region59: #{tpu_custom_call.1} parent=1 // pred_check_branch
      %114 = sbr.rel (0) target = $region61
    $region60: #{tpu_custom_call.1} parent=1 // pred_region
      _
    $region61: #{tpu_custom_call.1} parent=1 // pred_fallthru
      _
    // Predicated region
    $region62: #{tpu_custom_call.1} parent=1 // pred_check
      _
    $region63: #{tpu_custom_call.1} parent=1 // pred_check_branch
      %116 = sbr.rel (0) target = $region65
    $region64: #{tpu_custom_call.1} parent=1 // pred_region
      %s118 = ssub.s32 16, 16
      %119 = vsyncadd [#allocation12], %s118
      %s121 = sshll.u32 [#allocation11], 4
      %s122 = int_to_ptr.vmem [resolvable:$true] %s121
      %124 = dma.hbm_to_vmem [thread:$0]  %s15, 16, %s122, [#allocation12]
    $region65: #{tpu_custom_call.1} parent=1 // pred_fallthru
      _
    // Predicated region
    $region66: #{tpu_custom_call.1} parent=1 // pred_check
      _
    $region67: #{tpu_custom_call.1} parent=1 // pred_check_branch
      %126 = sbr.rel (0) target = $region69
    $region68: #{tpu_custom_call.1} parent=1 // pred_region
      %s128 = ssub.s32 1024, 1024
      %129 = vsyncadd [#allocation12], %s128
      %s130 = sshll.u32 [#allocation13], 4
      %s131 = int_to_ptr.vmem [resolvable:$true] %s130
      %136 = dma.hbm_to_vmem [thread:$0]  %s16, 1024, %s131, [#allocation12], 64, 64, 4
    $region69: #{tpu_custom_call.1} parent=1 // pred_fallthru
      _
    // Predicated region
    $region70: #{tpu_custom_call.1} parent=1 // pred_check
      _
    $region71: #{tpu_custom_call.1} parent=1 // pred_check_branch
      %138 = sbr.rel (0) target = $region73
    $region72: #{tpu_custom_call.1} parent=1 // pred_region
      %s140 = ssub.s32 16, 16
      %141 = vsyncadd [#allocation15], %s140
      %s143 = sshll.u32 [#allocation14], 4
      %s144 = int_to_ptr.vmem [resolvable:$true] %s143
      %146 = dma.hbm_to_vmem [thread:$0]  %s17, 16, %s144, [#allocation15]
    $region73: #{tpu_custom_call.1} parent=1 // pred_fallthru
      _
    // Predicated region
    $region74: #{tpu_custom_call.1} parent=1 // pred_check
      _
    $region75: #{tpu_custom_call.1} parent=1 // pred_check_branch
      %148 = sbr.rel (0) target = $region77
    $region76: #{tpu_custom_call.1} parent=1 // pred_region
      %s150 = ssub.s32 1024, 1024
      %151 = vsyncadd [#allocation15], %s150
      %s152 = sshll.u32 [#allocation16], 4
      %s153 = int_to_ptr.vmem [resolvable:$true] %s152
      %158 = dma.hbm_to_vmem [thread:$0]  %s18, 1024, %s153, [#allocation15], 64, 64, 4
    $region77: #{tpu_custom_call.1} parent=1 // pred_fallthru
      _
    // Predicated region
    $region78: #{tpu_custom_call.1} parent=1 // pred_check
      _
    $region79: #{tpu_custom_call.1} parent=1 // pred_check_branch
      %160 = sbr.rel (0) target = $region81
    $region80: #{tpu_custom_call.1} parent=1 // pred_region
      %s162 = ssub.s32 16, 16
      %163 = vsyncadd [#allocation18], %s162
      %s165 = sshll.u32 [#allocation17], 4
      %s166 = int_to_ptr.vmem [resolvable:$true] %s165
      %168 = dma.hbm_to_vmem [thread:$0]  %s19, 16, %s166, [#allocation18]
    $region81: #{tpu_custom_call.1} parent=1 // pred_fallthru
      _
    // Predicated region
    $region82: #{tpu_custom_call.1} parent=1 // pred_check
      _
    $region83: #{tpu_custom_call.1} parent=1 // pred_check_branch
      %170 = sbr.rel (0) target = $region85
    $region84: #{tpu_custom_call.1} parent=1 // pred_region
      %171 = dma.done [#allocation3], 2048
    $region85: #{tpu_custom_call.1} parent=1 // pred_fallthru
      _
    // Predicated region
    $region86: #{tpu_custom_call.1} parent=1 // pred_check
      _
    $region87: #{tpu_custom_call.1} parent=1 // pred_check_branch
      %173 = sbr.rel (0) target = $region89
    $region88: #{tpu_custom_call.1} parent=1 // pred_region
      %174 = dma.done [#allocation6], 1024
    $region89: #{tpu_custom_call.1} parent=1 // pred_fallthru
      _
    // Predicated region
    $region90: #{tpu_custom_call.1} parent=1 // pred_check
      _
    $region91: #{tpu_custom_call.1} parent=1 // pred_check_branch
      %176 = sbr.rel (0) target = $region93
    $region92: #{tpu_custom_call.1} parent=1 // pred_region
      %177 = dma.done [#allocation6], 1024
    $region93: #{tpu_custom_call.1} parent=1 // pred_fallthru
      _
    // Predicated region
    $region94: #{tpu_custom_call.1} parent=1 // pred_check
      _
    $region95: #{tpu_custom_call.1} parent=1 // pred_check_branch
      %179 = sbr.rel (0) target = $region97
    $region96: #{tpu_custom_call.1} parent=1 // pred_region
      %180 = dma.done [#allocation9], 1024
    $region97: #{tpu_custom_call.1} parent=1 // pred_fallthru
      _
    // Predicated region
    $region98: #{tpu_custom_call.1} parent=1 // pred_check
      _
    $region99: #{tpu_custom_call.1} parent=1 // pred_check_branch
      %182 = sbr.rel (0) target = $region101
    $region100: #{tpu_custom_call.1} parent=1 // pred_region
      %183 = dma.done [#allocation9], 1024
    $region101: #{tpu_custom_call.1} parent=1 // pred_fallthru
      _
    // Predicated region
    $region102: #{tpu_custom_call.1} parent=1 // pred_check
      _
    $region103: #{tpu_custom_call.1} parent=1 // pred_check_branch
      %185 = sbr.rel (0) target = $region105
    $region104: #{tpu_custom_call.1} parent=1 // pred_region
      %186 = dma.done [#allocation12], 16
    $region105: #{tpu_custom_call.1} parent=1 // pred_fallthru
      _
    // Predicated region
    $region106: #{tpu_custom_call.1} parent=1 // pred_check
      _
    $region107: #{tpu_custom_call.1} parent=1 // pred_check_branch
      %188 = sbr.rel (0) target = $region109
    $region108: #{tpu_custom_call.1} parent=1 // pred_region
      %189 = dma.done [#allocation12], 1024
    $region109: #{tpu_custom_call.1} parent=1 // pred_fallthru
      _
    // Predicated region
    $region110: #{tpu_custom_call.1} parent=1 // pred_check
      _
    $region111: #{tpu_custom_call.1} parent=1 // pred_check_branch
      %191 = sbr.rel (0) target = $region113
    $region112: #{tpu_custom_call.1} parent=1 // pred_region
      %192 = dma.done [#allocation15], 16
    $region113: #{tpu_custom_call.1} parent=1 // pred_fallthru
      _
    // Predicated region
    $region114: #{tpu_custom_call.1} parent=1 // pred_check
      _
    $region115: #{tpu_custom_call.1} parent=1 // pred_check_branch
      %194 = sbr.rel (0) target = $region117
    $region116: #{tpu_custom_call.1} parent=1 // pred_region
      %195 = dma.done [#allocation15], 1024
    $region117: #{tpu_custom_call.1} parent=1 // pred_fallthru
      _
    // Predicated region
    $region118: #{tpu_custom_call.1} parent=1 // pred_check
      _
    $region119: #{tpu_custom_call.1} parent=1 // pred_check_branch
      %197 = sbr.rel (0) target = $region121
    $region120: #{tpu_custom_call.1} parent=1 // pred_region
      %198 = dma.done [#allocation18], 16
    $region121: #{tpu_custom_call.1} parent=1 // pred_fallthru
      _
    %v200 = vld [vmem:[%s0] sm:$0xf]
    %v201 = vld [vmem:[#allocation2] sm:$0xf]
    %v202 = vld [vmem:[#allocation2 + $0x4] sm:$0xf]
    %v203 = vld [vmem:[#allocation2 + $0x8] sm:$0xf]
    %v204 = vld [vmem:[#allocation2 + $0xc] sm:$0xf]
    %v205 = vld [vmem:[#allocation2 + $0x10] sm:$0xf]
    %v206 = vld [vmem:[#allocation2 + $0x14] sm:$0xf]
    %v207 = vld [vmem:[#allocation2 + $0x18] sm:$0xf]
    %v208 = vld [vmem:[#allocation2 + $0x1c] sm:$0xf]
    %v209 = vld [vmem:[#allocation2 + $0x20] sm:$0xf]
    %v210 = vld [vmem:[#allocation2 + $0x24] sm:$0xf]
    %v211 = vld [vmem:[#allocation2 + $0x28] sm:$0xf]
    %v212 = vld [vmem:[#allocation2 + $0x2c] sm:$0xf]
    %v213 = vld [vmem:[#allocation2 + $0x30] sm:$0xf]
    %v214 = vld [vmem:[#allocation2 + $0x34] sm:$0xf]
    %v215 = vld [vmem:[#allocation2 + $0x38] sm:$0xf]
    %v216 = vld [vmem:[#allocation2 + $0x3c] sm:$0xf]
    %v217 = vld [vmem:[#allocation2 + $0x40] sm:$0xf]
    %v218 = vld [vmem:[#allocation2 + $0x44] sm:$0xf]
    %v219 = vld [vmem:[#allocation2 + $0x48] sm:$0xf]
    %v220 = vld [vmem:[#allocation2 + $0x4c] sm:$0xf]
    %v221 = vld [vmem:[#allocation2 + $0x50] sm:$0xf]
    %v222 = vld [vmem:[#allocation2 + $0x54] sm:$0xf]
    %v223 = vld [vmem:[#allocation2 + $0x58] sm:$0xf]
    %v224 = vld [vmem:[#allocation2 + $0x5c] sm:$0xf]
    %v225 = vld [vmem:[#allocation2 + $0x60] sm:$0xf]
    %v226 = vld [vmem:[#allocation2 + $0x64] sm:$0xf]
    %v227 = vld [vmem:[#allocation2 + $0x68] sm:$0xf]
    %v228 = vld [vmem:[#allocation2 + $0x6c] sm:$0xf]
    %v229 = vld [vmem:[#allocation2 + $0x70] sm:$0xf]
    %v230 = vld [vmem:[#allocation2 + $0x74] sm:$0xf]
    %v231 = vld [vmem:[#allocation2 + $0x78] sm:$0xf]
    %v232 = vld [vmem:[#allocation2 + $0x7c] sm:$0xf]
    %v233 = vld [vmem:[%s4] sm:$0x1]
    %v235 = vlaneseq
    %v236 = vshrl.u32 %v235, 7
    %v237 = vsub.s32 0, %v236
    %v238 = vrot.slane %v233, %v237
    %v242 = vunpack.c.l.s4 1983009808
    %v243 = vunpack.c.0.s8 %v242
    %v244 = vlaneseq
    %v245 = vshrl.u32 %v244, 7
    %v246 = vsub.s32 %v243, %v245
    %v247 = vrot.slane %v200, %v246
    %v248 = vcombine.high %v247, %v247
    %v283 = vunpack.c.l.b16 %v201
    %v284 = vunpack.c.l.b16 %v202
    %v285 = vunpack.c.l.b16 %v203
    %v286 = vunpack.c.l.b16 %v204
    %v287 = vunpack.c.l.b16 %v205
    %v288 = vunpack.c.l.b16 %v206
    %v289 = vunpack.c.l.b16 %v207
    %v290 = vunpack.c.l.b16 %v208
    %v291 = vunpack.c.l.b16 %v209
    %v292 = vunpack.c.l.b16 %v210
    %v293 = vunpack.c.l.b16 %v211
    %v294 = vunpack.c.l.b16 %v212
    %v295 = vunpack.c.l.b16 %v213
    %v296 = vunpack.c.l.b16 %v214
    %v297 = vunpack.c.l.b16 %v215
    %v298 = vunpack.c.l.b16 %v216
    %v299 = vunpack.c.l.b16 %v217
    %v300 = vunpack.c.l.b16 %v218
    %v301 = vunpack.c.l.b16 %v219
    %v302 = vunpack.c.l.b16 %v220
    %v303 = vunpack.c.l.b16 %v221
    %v304 = vunpack.c.l.b16 %v222
    %v305 = vunpack.c.l.b16 %v223
    %v306 = vunpack.c.l.b16 %v224
    %v307 = vunpack.c.l.b16 %v225
    %v308 = vunpack.c.l.b16 %v226
    %v309 = vunpack.c.l.b16 %v227
    %v310 = vunpack.c.l.b16 %v228
    %v311 = vunpack.c.l.b16 %v229
    %v312 = vunpack.c.l.b16 %v230
    %v313 = vunpack.c.l.b16 %v231
    %v314 = vunpack.c.l.b16 %v232
    %v315 = vpack.c.b16 %v284, %v283
    %v316 = vpack.c.b16 %v286, %v285
    %v317 = vpack.c.b16 %v288, %v287
    %v318 = vpack.c.b16 %v290, %v289
    %v319 = vpack.c.b16 %v292, %v291
    %v320 = vpack.c.b16 %v294, %v293
    %v321 = vpack.c.b16 %v296, %v295
    %v322 = vpack.c.b16 %v298, %v297
    %v323 = vpack.c.b16 %v300, %v299
    %v324 = vpack.c.b16 %v302, %v301
    %v325 = vpack.c.b16 %v304, %v303
    %v326 = vpack.c.b16 %v306, %v305
    %v327 = vpack.c.b16 %v308, %v307
    %v328 = vpack.c.b16 %v310, %v309
    %v329 = vpack.c.b16 %v312, %v311
    %v330 = vpack.c.b16 %v314, %v313
    %347 = vmatprep.subr.bf16.mxu0 0
    %348 = vmatpush1.bf16.msra.mxu0 %v315
    %349 = vmatprep.subr.bf16.mxu0 0
    %350 = vmatpush1.bf16.msra.mxu0 %v316
    %351 = vmatprep.subr.bf16.mxu0 0
    %352 = vmatpush1.bf16.msra.mxu0 %v317
    %353 = vmatprep.subr.bf16.mxu0 0
    %354 = vmatpush1.bf16.msra.mxu0 %v318
    %355 = vmatprep.subr.bf16.mxu0 0
    %356 = vmatpush1.bf16.msra.mxu0 %v319
    %357 = vmatprep.subr.bf16.mxu0 0
    %358 = vmatpush1.bf16.msra.mxu0 %v320
    %359 = vmatprep.subr.bf16.mxu0 0
    %360 = vmatpush1.bf16.msra.mxu0 %v321
    %361 = vmatprep.subr.bf16.mxu0 0
    %362 = vmatpush1.bf16.msra.mxu0 %v322
    %363 = vmatprep.subr.bf16.mxu0 0
    %364 = vmatpush1.bf16.msra.mxu0 %v323
    %365 = vmatprep.subr.bf16.mxu0 0
    %366 = vmatpush1.bf16.msra.mxu0 %v324
    %367 = vmatprep.subr.bf16.mxu0 0
    %368 = vmatpush1.bf16.msra.mxu0 %v325
    %369 = vmatprep.subr.bf16.mxu0 0
    %370 = vmatpush1.bf16.msra.mxu0 %v326
    %371 = vmatprep.subr.bf16.mxu0 0
    %372 = vmatpush1.bf16.msra.mxu0 %v327
    %373 = vmatprep.subr.bf16.mxu0 0
    %374 = vmatpush1.bf16.msra.mxu0 %v328
    %375 = vmatprep.subr.bf16.mxu0 0
    %376 = vmatpush1.bf16.msra.mxu0 %v329
    %377 = vmatprep.subr.bf16.mxu0 0
    %378 = vmatpush1.bf16.msra.mxu0 %v330
    %379 = vmatprep.mubr.bf16.mxu0 %v248
    %380 = vmatmul.mubr.bf16.gmra.mrb[0].mxu0 %v247
    %v381 = vpop.f32.mrb[0].mxu0
    %v382 = vadd.f32 %v238, %v381
    %v383 = vpop.f32.mrb[0].mxu0
    %v384 = vpop.f32.mrb[0].mxu0
    %v385 = vpop.f32.mrb[0].mxu0
    %386 = vdwg.mxu0
    %v387 = vld [vmem:[%s1] sm:$0xf]
    %v390 = vunpack.c.l.s4 1983009808
    %v391 = vunpack.c.0.s8 %v390
    %v392 = vlaneseq
    %v393 = vshrl.u32 %v392, 7
    %v394 = vsub.s32 %v391, %v393
    %v395 = vrot.slane %v387, %v394
    %v396 = vcombine.high %v395, %v395
    %399 = vmatprep.subr.bf16.mxu0 0
    %400 = vmatpush1.bf16.msra.mxu0 %v315
    %401 = vmatprep.subr.bf16.mxu0 0
    %402 = vmatpush1.bf16.msra.mxu0 %v316
    %403 = vmatprep.subr.bf16.mxu0 0
    %404 = vmatpush1.bf16.msra.mxu0 %v317
    %405 = vmatprep.subr.bf16.mxu0 0
    %406 = vmatpush1.bf16.msra.mxu0 %v318
    %407 = vmatprep.subr.bf16.mxu0 0
    %408 = vmatpush1.bf16.msra.mxu0 %v319
    %409 = vmatprep.subr.bf16.mxu0 0
    %410 = vmatpush1.bf16.msra.mxu0 %v320
    %411 = vmatprep.subr.bf16.mxu0 0
    %412 = vmatpush1.bf16.msra.mxu0 %v321
    %413 = vmatprep.subr.bf16.mxu0 0
    %414 = vmatpush1.bf16.msra.mxu0 %v322
    %415 = vmatprep.subr.bf16.mxu0 0
    %416 = vmatpush1.bf16.msra.mxu0 %v323
    %417 = vmatprep.subr.bf16.mxu0 0
    %418 = vmatpush1.bf16.msra.mxu0 %v324
    %419 = vmatprep.subr.bf16.mxu0 0
    %420 = vmatpush1.bf16.msra.mxu0 %v325
    %421 = vmatprep.subr.bf16.mxu0 0
    %422 = vmatpush1.bf16.msra.mxu0 %v326
    %423 = vmatprep.subr.bf16.mxu0 0
    %424 = vmatpush1.bf16.msra.mxu0 %v327
    %425 = vmatprep.subr.bf16.mxu0 0
    %426 = vmatpush1.bf16.msra.mxu0 %v328
    %427 = vmatprep.subr.bf16.mxu0 0
    %428 = vmatpush1.bf16.msra.mxu0 %v329
    %429 = vmatprep.subr.bf16.mxu0 0
    %430 = vmatpush1.bf16.msra.mxu0 %v330
    %431 = vmatprep.mubr.bf16.mxu0 %v396
    %432 = vmatmul.mubr.bf16.gmra.mrb[0].mxu0 %v395
    %v433 = vpop.f32.mrb[0].mxu0
    %v434 = vadd.f32 %v238, %v433
    %v435 = vpop.f32.mrb[0].mxu0
    %v436 = vpop.f32.mrb[0].mxu0
    %v437 = vpop.f32.mrb[0].mxu0
    %438 = vdwg.mxu0
    %v439 = vld [vmem:[%s2] sm:$0xf]
    %v440 = vld [vmem:[#allocation5] sm:$0xf]
    %v441 = vld [vmem:[#allocation5 + $0x4] sm:$0xf]
    %v442 = vld [vmem:[#allocation5 + $0x8] sm:$0xf]
    %v443 = vld [vmem:[#allocation5 + $0xc] sm:$0xf]
    %v444 = vld [vmem:[#allocation5 + $0x10] sm:$0xf]
    %v445 = vld [vmem:[#allocation5 + $0x14] sm:$0xf]
    %v446 = vld [vmem:[#allocation5 + $0x18] sm:$0xf]
    %v447 = vld [vmem:[#allocation5 + $0x1c] sm:$0xf]
    %v448 = vld [vmem:[#allocation5 + $0x20] sm:$0xf]
    %v449 = vld [vmem:[#allocation5 + $0x24] sm:$0xf]
    %v450 = vld [vmem:[#allocation5 + $0x28] sm:$0xf]
    %v451 = vld [vmem:[#allocation5 + $0x2c] sm:$0xf]
    %v452 = vld [vmem:[#allocation5 + $0x30] sm:$0xf]
    %v453 = vld [vmem:[#allocation5 + $0x34] sm:$0xf]
    %v454 = vld [vmem:[#allocation5 + $0x38] sm:$0xf]
    %v455 = vld [vmem:[#allocation5 + $0x3c] sm:$0xf]
    %v456 = vld [vmem:[%s6] sm:$0x1]
    %v458 = vlaneseq
    %v459 = vshrl.u32 %v458, 7
    %v460 = vsub.s32 0, %v459
    %v461 = vrot.slane %v456, %v460
    %v479 = vunpack.c.l.b16 %v440
    %v480 = vunpack.c.l.b16 %v441
    %v481 = vunpack.c.l.b16 %v442
    %v482 = vunpack.c.l.b16 %v443
    %v483 = vunpack.c.l.b16 %v444
    %v484 = vunpack.c.l.b16 %v445
    %v485 = vunpack.c.l.b16 %v446
    %v486 = vunpack.c.l.b16 %v447
    %v487 = vunpack.c.l.b16 %v448
    %v488 = vunpack.c.l.b16 %v449
    %v489 = vunpack.c.l.b16 %v450
    %v490 = vunpack.c.l.b16 %v451
    %v491 = vunpack.c.l.b16 %v452
    %v492 = vunpack.c.l.b16 %v453
    %v493 = vunpack.c.l.b16 %v454
    %v494 = vunpack.c.l.b16 %v455
    %v495 = vpack.c.b16 %v480, %v479
    %v496 = vpack.c.b16 %v482, %v481
    %v497 = vpack.c.b16 %v484, %v483
    %v498 = vpack.c.b16 %v486, %v485
    %v499 = vpack.c.b16 %v488, %v487
    %v500 = vpack.c.b16 %v490, %v489
    %v501 = vpack.c.b16 %v492, %v491
    %v502 = vpack.c.b16 %v494, %v493
    %511 = vmatprep.subr.bf16.mxu0 0
    %512 = vmatpush1.bf16.msra.mxu0 %v495
    %513 = vmatprep.subr.bf16.mxu0 0
    %514 = vmatpush1.bf16.msra.mxu0 %v496
    %515 = vmatprep.subr.bf16.mxu0 0
    %516 = vmatpush1.bf16.msra.mxu0 %v497
    %517 = vmatprep.subr.bf16.mxu0 0
    %518 = vmatpush1.bf16.msra.mxu0 %v498
    %519 = vmatprep.subr.bf16.mxu0 0
    %520 = vmatpush1.bf16.msra.mxu0 %v499
    %521 = vmatprep.subr.bf16.mxu0 0
    %522 = vmatpush1.bf16.msra.mxu0 %v500
    %523 = vmatprep.subr.bf16.mxu0 0
    %524 = vmatpush1.bf16.msra.mxu0 %v501
    %525 = vmatprep.subr.bf16.mxu0 0
    %526 = vmatpush1.bf16.msra.mxu0 %v502
    %527 = vmatprep.subr.bf16.mxu0 0
    %528 = vmatpush1.bf16.msra.mxu0 0
    %529 = vmatprep.subr.bf16.mxu0 0
    %530 = vmatpush1.bf16.msra.mxu0 0
    %531 = vmatprep.subr.bf16.mxu0 0
    %532 = vmatpush1.bf16.msra.mxu0 0
    %533 = vmatprep.subr.bf16.mxu0 0
    %534 = vmatpush1.bf16.msra.mxu0 0
    %535 = vmatprep.subr.bf16.mxu0 0
    %536 = vmatpush1.bf16.msra.mxu0 0
    %537 = vmatprep.subr.bf16.mxu0 0
    %538 = vmatpush1.bf16.msra.mxu0 0
    %539 = vmatprep.subr.bf16.mxu0 0
    %540 = vmatpush1.bf16.msra.mxu0 0
    %541 = vmatprep.subr.bf16.mxu0 0
    %542 = vmatpush1.bf16.msra.mxu0 0
    %543 = vmatprep.mubr.bf16.mxu0 0
    %544 = vmatmul.mubr.bf16.gmra.mrb[0].mxu0 %v439
    %v545 = vpop.f32.mrb[0].mxu0
    %v546 = vadd.f32 %v461, %v545
    %v547 = vpop.f32.mrb[0].mxu0
    %v548 = vpop.f32.mrb[0].mxu0
    %v549 = vpop.f32.mrb[0].mxu0
    %550 = vdwg.mxu0
    %v551 = vrot.slane %v546, 4
    %v552 = vadd.f32 %v546, %v551
    %v553 = vrot.slane %v552, 2
    %v554 = vadd.f32 %v552, %v553
    %v555 = vrot.slane %v554, 1
    %v556 = vadd.f32 %v554, %v555
    %v557 = vadd.f32 %v556, 0.0
    %v558 = vmul.f32 %v557, 0.125
    %v559 = vsub.f32 %v546, %v558
    %v560 = vmul.f32 %v559, %v559
    %v561 = vrot.slane %v560, 4
    %v562 = vadd.f32 %v560, %v561
    %v563 = vrot.slane %v562, 2
    %v564 = vadd.f32 %v562, %v563
    %v565 = vrot.slane %v564, 1
    %v566 = vadd.f32 %v564, %v565
    %v567 = vadd.f32 %v566, 0.0
    %v568 = vmul.f32 %v567, 0.125
    %v569 = vadd.f32 %v568, 1e-05
    %v570 = vrsqrt.pop %v569
    %v571 = vmul.f32 %v559, %v570
    %v572 = vld [vmem:[%s7] sm:$0x1]
    %v574 = vlaneseq
    %v575 = vshrl.u32 %v574, 7
    %v576 = vsub.s32 0, %v575
    %v577 = vrot.slane %v572, %v576
    %v579 = vmul.f32 %v571, %v577
    %v580 = vld [vmem:[%s8] sm:$0x1]
    %v582 = vlaneseq
    %v583 = vshrl.u32 %v582, 7
    %v584 = vsub.s32 0, %v583
    %v585 = vrot.slane %v580, %v584
    %v587 = vadd.f32 %v579, %v585
    %v588 = vmul.f32 %v587, 0.5
    %v589 = vmul.f32 %v587, 0.70710677
    %v590 = verf.f32.pop %v589
    %v591 = vadd.f32 %v590, 1.0
    %v592 = vmul.f32 %v588, %v591
    %v593 = vpack.c.bf16 %v592, %v592
    %v594 = vld [vmem:[#allocation7] sm:$0xf]
    %v595 = vld [vmem:[#allocation7 + $0x4] sm:$0xf]
    %v596 = vld [vmem:[#allocation7 + $0x8] sm:$0xf]
    %v597 = vld [vmem:[#allocation7 + $0xc] sm:$0xf]
    %v598 = vld [vmem:[#allocation7 + $0x10] sm:$0xf]
    %v599 = vld [vmem:[#allocation7 + $0x14] sm:$0xf]
    %v600 = vld [vmem:[#allocation7 + $0x18] sm:$0xf]
    %v601 = vld [vmem:[#allocation7 + $0x1c] sm:$0xf]
    %v602 = vld [vmem:[#allocation7 + $0x20] sm:$0xf]
    %v603 = vld [vmem:[#allocation7 + $0x24] sm:$0xf]
    %v604 = vld [vmem:[#allocation7 + $0x28] sm:$0xf]
    %v605 = vld [vmem:[#allocation7 + $0x2c] sm:$0xf]
    %v606 = vld [vmem:[#allocation7 + $0x30] sm:$0xf]
    %v607 = vld [vmem:[#allocation7 + $0x34] sm:$0xf]
    %v608 = vld [vmem:[#allocation7 + $0x38] sm:$0xf]
    %v609 = vld [vmem:[#allocation7 + $0x3c] sm:$0xf]
    %v610 = vld [vmem:[%s10] sm:$0x1]
    %v612 = vlaneseq
    %v613 = vshrl.u32 %v612, 7
    %v614 = vsub.s32 0, %v613
    %v615 = vrot.slane %v610, %v614
    %v633 = vunpack.c.l.b16 %v594
    %v634 = vunpack.c.l.b16 %v595
    %v635 = vunpack.c.l.b16 %v596
    %v636 = vunpack.c.l.b16 %v597
    %v637 = vunpack.c.l.b16 %v598
    %v638 = vunpack.c.l.b16 %v599
    %v639 = vunpack.c.l.b16 %v600
    %v640 = vunpack.c.l.b16 %v601
    %v641 = vunpack.c.l.b16 %v602
    %v642 = vunpack.c.l.b16 %v603
    %v643 = vunpack.c.l.b16 %v604
    %v644 = vunpack.c.l.b16 %v605
    %v645 = vunpack.c.l.b16 %v606
    %v646 = vunpack.c.l.b16 %v607
    %v647 = vunpack.c.l.b16 %v608
    %v648 = vunpack.c.l.b16 %v609
    %v649 = vpack.c.b16 %v634, %v633
    %v650 = vpack.c.b16 %v636, %v635
    %v651 = vpack.c.b16 %v638, %v637
    %v652 = vpack.c.b16 %v640, %v639
    %v653 = vpack.c.b16 %v642, %v641
    %v654 = vpack.c.b16 %v644, %v643
    %v655 = vpack.c.b16 %v646, %v645
    %v656 = vpack.c.b16 %v648, %v647
    %665 = vmatprep.subr.bf16.mxu0 0
    %666 = vmatpush1.bf16.msra.mxu0 %v649
    %667 = vmatprep.subr.bf16.mxu0 0
    %668 = vmatpush1.bf16.msra.mxu0 %v650
    %669 = vmatprep.subr.bf16.mxu0 0
    %670 = vmatpush1.bf16.msra.mxu0 %v651
    %671 = vmatprep.subr.bf16.mxu0 0
    %672 = vmatpush1.bf16.msra.mxu0 %v652
    %673 = vmatprep.subr.bf16.mxu0 0
    %674 = vmatpush1.bf16.msra.mxu0 %v653
    %675 = vmatprep.subr.bf16.mxu0 0
    %676 = vmatpush1.bf16.msra.mxu0 %v654
    %677 = vmatprep.subr.bf16.mxu0 0
    %678 = vmatpush1.bf16.msra.mxu0 %v655
    %679 = vmatprep.subr.bf16.mxu0 0
    %680 = vmatpush1.bf16.msra.mxu0 %v656
    %681 = vmatprep.subr.bf16.mxu0 0
    %682 = vmatpush1.bf16.msra.mxu0 0
    %683 = vmatprep.subr.bf16.mxu0 0
    %684 = vmatpush1.bf16.msra.mxu0 0
    %685 = vmatprep.subr.bf16.mxu0 0
    %686 = vmatpush1.bf16.msra.mxu0 0
    %687 = vmatprep.subr.bf16.mxu0 0
    %688 = vmatpush1.bf16.msra.mxu0 0
    %689 = vmatprep.subr.bf16.mxu0 0
    %690 = vmatpush1.bf16.msra.mxu0 0
    %691 = vmatprep.subr.bf16.mxu0 0
    %692 = vmatpush1.bf16.msra.mxu0 0
    %693 = vmatprep.subr.bf16.mxu0 0
    %694 = vmatpush1.bf16.msra.mxu0 0
    %695 = vmatprep.subr.bf16.mxu0 0
    %696 = vmatpush1.bf16.msra.mxu0 0
    %697 = vmatprep.mubr.bf16.mxu0 0
    %698 = vmatmul.mubr.bf16.gmra.mrb[0].mxu0 %v593
    %v699 = vpop.f32.mrb[0].mxu0
    %v700 = vadd.f32 %v615, %v699
    %v701 = vpop.f32.mrb[0].mxu0
    %v702 = vpop.f32.mrb[0].mxu0
    %v703 = vpop.f32.mrb[0].mxu0
    %704 = vdwg.mxu0
    %v705 = vmul.f32 %v700, %v700
    %706 = vadd.xlane.f32.xlu0 %v705
    %v707 = vpop.xlane.xlu0 %706
    %v708 = vmax.f32 %v707, 1e-24
    %v709 = vrsqrt.pop %v708
    %v710 = vmul.f32 %v700, %v709
    %v711 = vpack.c.bf16 %v710, %v710
    %v712 = vld [vmem:[#allocation8] sm:$0xf]
    %v713 = vld [vmem:[#allocation8 + $0x4] sm:$0xf]
    %v714 = vld [vmem:[#allocation8 + $0x8] sm:$0xf]
    %v715 = vld [vmem:[#allocation8 + $0xc] sm:$0xf]
    %v716 = vld [vmem:[#allocation8 + $0x10] sm:$0xf]
    %v717 = vld [vmem:[#allocation8 + $0x14] sm:$0xf]
    %v718 = vld [vmem:[#allocation8 + $0x18] sm:$0xf]
    %v719 = vld [vmem:[#allocation8 + $0x1c] sm:$0xf]
    %v720 = vld [vmem:[#allocation8 + $0x20] sm:$0xf]
    %v721 = vld [vmem:[#allocation8 + $0x24] sm:$0xf]
    %v722 = vld [vmem:[#allocation8 + $0x28] sm:$0xf]
    %v723 = vld [vmem:[#allocation8 + $0x2c] sm:$0xf]
    %v724 = vld [vmem:[#allocation8 + $0x30] sm:$0xf]
    %v725 = vld [vmem:[#allocation8 + $0x34] sm:$0xf]
    %v726 = vld [vmem:[#allocation8 + $0x38] sm:$0xf]
    %v727 = vld [vmem:[#allocation8 + $0x3c] sm:$0xf]
    %v744 = vunpack.c.l.b16 %v712
    %v745 = vunpack.c.l.b16 %v713
    %v746 = vunpack.c.l.b16 %v714
    %v747 = vunpack.c.l.b16 %v715
    %v748 = vunpack.c.l.b16 %v716
    %v749 = vunpack.c.l.b16 %v717
    %v750 = vunpack.c.l.b16 %v718
    %v751 = vunpack.c.l.b16 %v719
    %v752 = vunpack.c.l.b16 %v720
    %v753 = vunpack.c.l.b16 %v721
    %v754 = vunpack.c.l.b16 %v722
    %v755 = vunpack.c.l.b16 %v723
    %v756 = vunpack.c.l.b16 %v724
    %v757 = vunpack.c.l.b16 %v725
    %v758 = vunpack.c.l.b16 %v726
    %v759 = vunpack.c.l.b16 %v727
    %v760 = vpack.c.b16 %v745, %v744
    %v761 = vpack.c.b16 %v747, %v746
    %v762 = vpack.c.b16 %v749, %v748
    %v763 = vpack.c.b16 %v751, %v750
    %v764 = vpack.c.b16 %v753, %v752
    %v765 = vpack.c.b16 %v755, %v754
    %v766 = vpack.c.b16 %v757, %v756
    %v767 = vpack.c.b16 %v759, %v758
    %776 = vmatprep.subr.bf16.mxu0 0
    %777 = vmatpush1.bf16.msra.mxu0 %v760
    %778 = vmatprep.subr.bf16.mxu0 0
    %779 = vmatpush1.bf16.msra.mxu0 %v761
    %780 = vmatprep.subr.bf16.mxu0 0
    %781 = vmatpush1.bf16.msra.mxu0 %v762
    %782 = vmatprep.subr.bf16.mxu0 0
    %783 = vmatpush1.bf16.msra.mxu0 %v763
    %784 = vmatprep.subr.bf16.mxu0 0
    %785 = vmatpush1.bf16.msra.mxu0 %v764
    %786 = vmatprep.subr.bf16.mxu0 0
    %787 = vmatpush1.bf16.msra.mxu0 %v765
    %788 = vmatprep.subr.bf16.mxu0 0
    %789 = vmatpush1.bf16.msra.mxu0 %v766
    %790 = vmatprep.subr.bf16.mxu0 0
    %791 = vmatpush1.bf16.msra.mxu0 %v767
    %792 = vmatprep.subr.bf16.mxu0 0
    %793 = vmatpush1.bf16.msra.mxu0 0
    %794 = vmatprep.subr.bf16.mxu0 0
    %795 = vmatpush1.bf16.msra.mxu0 0
    %796 = vmatprep.subr.bf16.mxu0 0
    %797 = vmatpush1.bf16.msra.mxu0 0
    %798 = vmatprep.subr.bf16.mxu0 0
    %799 = vmatpush1.bf16.msra.mxu0 0
    %800 = vmatprep.subr.bf16.mxu0 0
    %801 = vmatpush1.bf16.msra.mxu0 0
    %802 = vmatprep.subr.bf16.mxu0 0
    %803 = vmatpush1.bf16.msra.mxu0 0
    %804 = vmatprep.subr.bf16.mxu0 0
    %805 = vmatpush1.bf16.msra.mxu0 0
    %806 = vmatprep.subr.bf16.mxu0 0
    %807 = vmatpush1.bf16.msra.mxu0 0
    %808 = vmatprep.mubr.bf16.mxu0 0
    %809 = vmatmul.mubr.bf16.gmra.mrb[0].mxu0 %v711
    %v810 = vpop.f32.mrb[0].mxu0
    %v811 = vadd.f32 0.0, %v810
    %v812 = vpop.f32.mrb[0].mxu0
    %v813 = vpop.f32.mrb[0].mxu0
    %v814 = vpop.f32.mrb[0].mxu0
    %815 = vdwg.mxu0
    %v816 = vpack.c.bf16 %v382, %v382
    %v817 = vld [vmem:[#allocation10] sm:$0xf]
    %v818 = vld [vmem:[#allocation10 + $0x4] sm:$0xf]
    %v819 = vld [vmem:[#allocation10 + $0x8] sm:$0xf]
    %v820 = vld [vmem:[#allocation10 + $0xc] sm:$0xf]
    %v821 = vld [vmem:[#allocation10 + $0x10] sm:$0xf]
    %v822 = vld [vmem:[#allocation10 + $0x14] sm:$0xf]
    %v823 = vld [vmem:[#allocation10 + $0x18] sm:$0xf]
    %v824 = vld [vmem:[#allocation10 + $0x1c] sm:$0xf]
    %v825 = vld [vmem:[#allocation10 + $0x20] sm:$0xf]
    %v826 = vld [vmem:[#allocation10 + $0x24] sm:$0xf]
    %v827 = vld [vmem:[#allocation10 + $0x28] sm:$0xf]
    %v828 = vld [vmem:[#allocation10 + $0x2c] sm:$0xf]
    %v829 = vld [vmem:[#allocation10 + $0x30] sm:$0xf]
    %v830 = vld [vmem:[#allocation10 + $0x34] sm:$0xf]
    %v831 = vld [vmem:[#allocation10 + $0x38] sm:$0xf]
    %v832 = vld [vmem:[#allocation10 + $0x3c] sm:$0xf]
    %v833 = vld [vmem:[%s13] sm:$0x1]
    %v835 = vlaneseq
    %v836 = vshrl.u32 %v835, 7
    %v837 = vsub.s32 0, %v836
    %v838 = vrot.slane %v833, %v837
    %v856 = vunpack.c.l.b16 %v817
    %v857 = vunpack.c.l.b16 %v818
    %v858 = vunpack.c.l.b16 %v819
    %v859 = vunpack.c.l.b16 %v820
    %v860 = vunpack.c.l.b16 %v821
    %v861 = vunpack.c.l.b16 %v822
    %v862 = vunpack.c.l.b16 %v823
    %v863 = vunpack.c.l.b16 %v824
    %v864 = vunpack.c.l.b16 %v825
    %v865 = vunpack.c.l.b16 %v826
    %v866 = vunpack.c.l.b16 %v827
    %v867 = vunpack.c.l.b16 %v828
    %v868 = vunpack.c.l.b16 %v829
    %v869 = vunpack.c.l.b16 %v830
    %v870 = vunpack.c.l.b16 %v831
    %v871 = vunpack.c.l.b16 %v832
    %v872 = vpack.c.b16 %v857, %v856
    %v873 = vpack.c.b16 %v859, %v858
    %v874 = vpack.c.b16 %v861, %v860
    %v875 = vpack.c.b16 %v863, %v862
    %v876 = vpack.c.b16 %v865, %v864
    %v877 = vpack.c.b16 %v867, %v866
    %v878 = vpack.c.b16 %v869, %v868
    %v879 = vpack.c.b16 %v871, %v870
    %888 = vmatprep.subr.bf16.mxu0 0
    %889 = vmatpush1.bf16.msra.mxu0 %v872
    %890 = vmatprep.subr.bf16.mxu0 0
    %891 = vmatpush1.bf16.msra.mxu0 %v873
    %892 = vmatprep.subr.bf16.mxu0 0
    %893 = vmatpush1.bf16.msra.mxu0 %v874
    %894 = vmatprep.subr.bf16.mxu0 0
    %895 = vmatpush1.bf16.msra.mxu0 %v875
    %896 = vmatprep.subr.bf16.mxu0 0
    %897 = vmatpush1.bf16.msra.mxu0 %v876
    %898 = vmatprep.subr.bf16.mxu0 0
    %899 = vmatpush1.bf16.msra.mxu0 %v877
    %900 = vmatprep.subr.bf16.mxu0 0
    %901 = vmatpush1.bf16.msra.mxu0 %v878
    %902 = vmatprep.subr.bf16.mxu0 0
    %903 = vmatpush1.bf16.msra.mxu0 %v879
    %904 = vmatprep.subr.bf16.mxu0 0
    %905 = vmatpush1.bf16.msra.mxu0 0
    %906 = vmatprep.subr.bf16.mxu0 0
    %907 = vmatpush1.bf16.msra.mxu0 0
    %908 = vmatprep.subr.bf16.mxu0 0
    %909 = vmatpush1.bf16.msra.mxu0 0
    %910 = vmatprep.subr.bf16.mxu0 0
    %911 = vmatpush1.bf16.msra.mxu0 0
    %912 = vmatprep.subr.bf16.mxu0 0
    %913 = vmatpush1.bf16.msra.mxu0 0
    %914 = vmatprep.subr.bf16.mxu0 0
    %915 = vmatpush1.bf16.msra.mxu0 0
    %916 = vmatprep.subr.bf16.mxu0 0
    %917 = vmatpush1.bf16.msra.mxu0 0
    %918 = vmatprep.subr.bf16.mxu0 0
    %919 = vmatpush1.bf16.msra.mxu0 0
    %920 = vmatprep.mubr.bf16.mxu0 0
    %921 = vmatmul.mubr.bf16.gmra.mrb[0].mxu0 %v816
    %v922 = vpop.f32.mrb[0].mxu0
    %v923 = vadd.f32 %v838, %v922
    %v924 = vpop.f32.mrb[0].mxu0
    %v925 = vpop.f32.mrb[0].mxu0
    %v926 = vpop.f32.mrb[0].mxu0
    %927 = vdwg.mxu0
    %v928 = vpack.c.bf16 %v434, %v434
    %929 = vmatprep.subr.bf16.mxu0 0
    %930 = vmatpush1.bf16.msra.mxu0 %v872
    %931 = vmatprep.subr.bf16.mxu0 0
    %932 = vmatpush1.bf16.msra.mxu0 %v873
    %933 = vmatprep.subr.bf16.mxu0 0
    %934 = vmatpush1.bf16.msra.mxu0 %v874
    %935 = vmatprep.subr.bf16.mxu0 0
    %936 = vmatpush1.bf16.msra.mxu0 %v875
    %937 = vmatprep.subr.bf16.mxu0 0
    %938 = vmatpush1.bf16.msra.mxu0 %v876
    %939 = vmatprep.subr.bf16.mxu0 0
    %940 = vmatpush1.bf16.msra.mxu0 %v877
    %941 = vmatprep.subr.bf16.mxu0 0
    %942 = vmatpush1.bf16.msra.mxu0 %v878
    %943 = vmatprep.subr.bf16.mxu0 0
    %944 = vmatpush1.bf16.msra.mxu0 %v879
    %945 = vmatprep.subr.bf16.mxu0 0
    %946 = vmatpush1.bf16.msra.mxu0 0
    %947 = vmatprep.subr.bf16.mxu0 0
    %948 = vmatpush1.bf16.msra.mxu0 0
    %949 = vmatprep.subr.bf16.mxu0 0
    %950 = vmatpush1.bf16.msra.mxu0 0
    %951 = vmatprep.subr.bf16.mxu0 0
    %952 = vmatpush1.bf16.msra.mxu0 0
    %953 = vmatprep.subr.bf16.mxu0 0
    %954 = vmatpush1.bf16.msra.mxu0 0
    %955 = vmatprep.subr.bf16.mxu0 0
    %956 = vmatpush1.bf16.msra.mxu0 0
    %957 = vmatprep.subr.bf16.mxu0 0
    %958 = vmatpush1.bf16.msra.mxu0 0
    %959 = vmatprep.subr.bf16.mxu0 0
    %960 = vmatpush1.bf16.msra.mxu0 0
    %961 = vmatprep.mubr.bf16.mxu0 0
    %962 = vmatmul.mubr.bf16.gmra.mrb[0].mxu0 %v928
    %v963 = vpop.f32.mrb[0].mxu0
    %v964 = vadd.f32 %v838, %v963
    %v965 = vpop.f32.mrb[0].mxu0
    %v966 = vpop.f32.mrb[0].mxu0
    %v967 = vpop.f32.mrb[0].mxu0
    %968 = vdwg.mxu0
    %vm969 = vcmask 1043456
    %v970 = vsel %vm969, %v923, 0.0
    %v971 = vrot.slane %v970, 4
    %v972 = vadd.f32 %v970, %v971
    %v973 = vrot.slane %v972, 2
    %v974 = vadd.f32 %v972, %v973
    %v975 = vrot.slane %v974, 1
    %v976 = vadd.f32 %v974, %v975
    %v977 = vadd.f32 %v976, 0.0
    %v978 = vsel %vm969, %v964, 0.0
    %v979 = vrot.slane %v978, 4
    %v980 = vadd.f32 %v978, %v979
    %v981 = vrot.slane %v980, 2
    %v982 = vadd.f32 %v980, %v981
    %v983 = vrot.slane %v982, 1
    %v984 = vadd.f32 %v982, %v983
    %v985 = vadd.f32 %v977, %v984
    %v986 = vmul.f32 %v985, 0.125
    %v987 = vsub.f32 %v923, %v986
    %v988 = vmul.f32 %v987, %v987
    %v989 = vsel %vm969, %v988, 0.0
    %v990 = vrot.slane %v989, 4
    %v991 = vadd.f32 %v989, %v990
    %v992 = vrot.slane %v991, 2
    %v993 = vadd.f32 %v991, %v992
    %v994 = vrot.slane %v993, 1
    %v995 = vadd.f32 %v993, %v994
    %v996 = vadd.f32 %v995, 0.0
    %v997 = vsub.f32 %v964, %v986
    %v998 = vmul.f32 %v997, %v997
    %v999 = vsel %vm969, %v998, 0.0
    %v1000 = vrot.slane %v999, 4
    %v1001 = vadd.f32 %v999, %v1000
    %v1002 = vrot.slane %v1001, 2
    %v1003 = vadd.f32 %v1001, %v1002
    %v1004 = vrot.slane %v1003, 1
    %v1005 = vadd.f32 %v1003, %v1004
    %v1006 = vadd.f32 %v996, %v1005
    %v1007 = vmul.f32 %v1006, 0.125
    %v1008 = vadd.f32 %v1007, 1e-05
    %v1009 = vrsqrt.pop %v1008
    %v1010 = vmul.f32 %v987, %v1009
    %v1011 = vld [vmem:[%s14] sm:$0x1]
    %v1013 = vlaneseq
    %v1014 = vshrl.u32 %v1013, 7
    %v1015 = vsub.s32 0, %v1014
    %v1016 = vrot.slane %v1011, %v1015
    %v1018 = vmul.f32 %v1010, %v1016
    %v1019 = vld [vmem:[#allocation11] sm:$0x1]
    %v1021 = vlaneseq
    %v1022 = vshrl.u32 %v1021, 7
    %v1023 = vsub.s32 0, %v1022
    %v1024 = vrot.slane %v1019, %v1023
    %v1026 = vadd.f32 %v1018, %v1024
    %v1027 = vmul.f32 %v1026, 0.5
    %v1028 = vmul.f32 %v1026, 0.70710677
    %v1029 = verf.f32.pop %v1028
    %v1030 = vadd.f32 %v1029, 1.0
    %v1031 = vmul.f32 %v1027, %v1030
    %v1032 = vpack.c.bf16 %v1031, %v1031
    %v1033 = vld [vmem:[#allocation13] sm:$0xf]
    %v1034 = vld [vmem:[#allocation13 + $0x4] sm:$0xf]
    %v1035 = vld [vmem:[#allocation13 + $0x8] sm:$0xf]
    %v1036 = vld [vmem:[#allocation13 + $0xc] sm:$0xf]
    %v1037 = vld [vmem:[#allocation13 + $0x10] sm:$0xf]
    %v1038 = vld [vmem:[#allocation13 + $0x14] sm:$0xf]
    %v1039 = vld [vmem:[#allocation13 + $0x18] sm:$0xf]
    %v1040 = vld [vmem:[#allocation13 + $0x1c] sm:$0xf]
    %v1041 = vld [vmem:[#allocation13 + $0x20] sm:$0xf]
    %v1042 = vld [vmem:[#allocation13 + $0x24] sm:$0xf]
    %v1043 = vld [vmem:[#allocation13 + $0x28] sm:$0xf]
    %v1044 = vld [vmem:[#allocation13 + $0x2c] sm:$0xf]
    %v1045 = vld [vmem:[#allocation13 + $0x30] sm:$0xf]
    %v1046 = vld [vmem:[#allocation13 + $0x34] sm:$0xf]
    %v1047 = vld [vmem:[#allocation13 + $0x38] sm:$0xf]
    %v1048 = vld [vmem:[#allocation13 + $0x3c] sm:$0xf]
    %v1049 = vld [vmem:[#allocation14] sm:$0x1]
    %v1051 = vlaneseq
    %v1052 = vshrl.u32 %v1051, 7
    %v1053 = vsub.s32 0, %v1052
    %v1054 = vrot.slane %v1049, %v1053
    %v1072 = vunpack.c.l.b16 %v1033
    %v1073 = vunpack.c.l.b16 %v1034
    %v1074 = vunpack.c.l.b16 %v1035
    %v1075 = vunpack.c.l.b16 %v1036
    %v1076 = vunpack.c.l.b16 %v1037
    %v1077 = vunpack.c.l.b16 %v1038
    %v1078 = vunpack.c.l.b16 %v1039
    %v1079 = vunpack.c.l.b16 %v1040
    %v1080 = vunpack.c.l.b16 %v1041
    %v1081 = vunpack.c.l.b16 %v1042
    %v1082 = vunpack.c.l.b16 %v1043
    %v1083 = vunpack.c.l.b16 %v1044
    %v1084 = vunpack.c.l.b16 %v1045
    %v1085 = vunpack.c.l.b16 %v1046
    %v1086 = vunpack.c.l.b16 %v1047
    %v1087 = vunpack.c.l.b16 %v1048
    %v1088 = vpack.c.b16 %v1073, %v1072
    %v1089 = vpack.c.b16 %v1075, %v1074
    %v1090 = vpack.c.b16 %v1077, %v1076
    %v1091 = vpack.c.b16 %v1079, %v1078
    %v1092 = vpack.c.b16 %v1081, %v1080
    %v1093 = vpack.c.b16 %v1083, %v1082
    %v1094 = vpack.c.b16 %v1085, %v1084
    %v1095 = vpack.c.b16 %v1087, %v1086
    %1104 = vmatprep.subr.bf16.mxu0 0
    %1105 = vmatpush1.bf16.msra.mxu0 %v1088
    %1106 = vmatprep.subr.bf16.mxu0 0
    %1107 = vmatpush1.bf16.msra.mxu0 %v1089
    %1108 = vmatprep.subr.bf16.mxu0 0
    %1109 = vmatpush1.bf16.msra.mxu0 %v1090
    %1110 = vmatprep.subr.bf16.mxu0 0
    %1111 = vmatpush1.bf16.msra.mxu0 %v1091
    %1112 = vmatprep.subr.bf16.mxu0 0
    %1113 = vmatpush1.bf16.msra.mxu0 %v1092
    %1114 = vmatprep.subr.bf16.mxu0 0
    %1115 = vmatpush1.bf16.msra.mxu0 %v1093
    %1116 = vmatprep.subr.bf16.mxu0 0
    %1117 = vmatpush1.bf16.msra.mxu0 %v1094
    %1118 = vmatprep.subr.bf16.mxu0 0
    %1119 = vmatpush1.bf16.msra.mxu0 %v1095
    %1120 = vmatprep.subr.bf16.mxu0 0
    %1121 = vmatpush1.bf16.msra.mxu0 0
    %1122 = vmatprep.subr.bf16.mxu0 0
    %1123 = vmatpush1.bf16.msra.mxu0 0
    %1124 = vmatprep.subr.bf16.mxu0 0
    %1125 = vmatpush1.bf16.msra.mxu0 0
    %1126 = vmatprep.subr.bf16.mxu0 0
    %1127 = vmatpush1.bf16.msra.mxu0 0
    %1128 = vmatprep.subr.bf16.mxu0 0
    %1129 = vmatpush1.bf16.msra.mxu0 0
    %1130 = vmatprep.subr.bf16.mxu0 0
    %1131 = vmatpush1.bf16.msra.mxu0 0
    %1132 = vmatprep.subr.bf16.mxu0 0
    %1133 = vmatpush1.bf16.msra.mxu0 0
    %1134 = vmatprep.subr.bf16.mxu0 0
    %1135 = vmatpush1.bf16.msra.mxu0 0
    %1136 = vmatprep.mubr.bf16.mxu0 0
    %1137 = vmatmul.mubr.bf16.gmra.mrb[0].mxu0 %v1032
    %v1138 = vpop.f32.mrb[0].mxu0
    %v1139 = vadd.f32 %v1054, %v1138
    %v1140 = vpop.f32.mrb[0].mxu0
    %v1141 = vpop.f32.mrb[0].mxu0
    %v1142 = vpop.f32.mrb[0].mxu0
    %1143 = vdwg.mxu0
    %v1144 = vmul.f32 %v1139, %v1139
    %v1145 = vsel %vm969, %v1144, 0.0
    %1146 = vadd.xlane.f32.xlu0 %v1145
    %v1147 = vpop.xlane.xlu0 %1146
    %v1148 = vmax.f32 %v1147, 1e-24
    %v1149 = vrsqrt.pop %v1148
    %v1150 = vmul.f32 %v1139, %v1149
    %v1151 = vpack.c.bf16 %v1150, %v1150
    %v1152 = vld [vmem:[#allocation16] sm:$0xf]
    %v1153 = vld [vmem:[#allocation16 + $0x4] sm:$0xf]
    %v1154 = vld [vmem:[#allocation16 + $0x8] sm:$0xf]
    %v1155 = vld [vmem:[#allocation16 + $0xc] sm:$0xf]
    %v1156 = vld [vmem:[#allocation16 + $0x10] sm:$0xf]
    %v1157 = vld [vmem:[#allocation16 + $0x14] sm:$0xf]
    %v1158 = vld [vmem:[#allocation16 + $0x18] sm:$0xf]
    %v1159 = vld [vmem:[#allocation16 + $0x1c] sm:$0xf]
    %v1160 = vld [vmem:[#allocation16 + $0x20] sm:$0xf]
    %v1161 = vld [vmem:[#allocation16 + $0x24] sm:$0xf]
    %v1162 = vld [vmem:[#allocation16 + $0x28] sm:$0xf]
    %v1163 = vld [vmem:[#allocation16 + $0x2c] sm:$0xf]
    %v1164 = vld [vmem:[#allocation16 + $0x30] sm:$0xf]
    %v1165 = vld [vmem:[#allocation16 + $0x34] sm:$0xf]
    %v1166 = vld [vmem:[#allocation16 + $0x38] sm:$0xf]
    %v1167 = vld [vmem:[#allocation16 + $0x3c] sm:$0xf]
    %v1184 = vunpack.c.l.b16 %v1152
    %v1185 = vunpack.c.l.b16 %v1153
    %v1186 = vunpack.c.l.b16 %v1154
    %v1187 = vunpack.c.l.b16 %v1155
    %v1188 = vunpack.c.l.b16 %v1156
    %v1189 = vunpack.c.l.b16 %v1157
    %v1190 = vunpack.c.l.b16 %v1158
    %v1191 = vunpack.c.l.b16 %v1159
    %v1192 = vunpack.c.l.b16 %v1160
    %v1193 = vunpack.c.l.b16 %v1161
    %v1194 = vunpack.c.l.b16 %v1162
    %v1195 = vunpack.c.l.b16 %v1163
    %v1196 = vunpack.c.l.b16 %v1164
    %v1197 = vunpack.c.l.b16 %v1165
    %v1198 = vunpack.c.l.b16 %v1166
    %v1199 = vunpack.c.l.b16 %v1167
    %v1200 = vpack.c.b16 %v1185, %v1184
    %v1201 = vpack.c.b16 %v1187, %v1186
    %v1202 = vpack.c.b16 %v1189, %v1188
    %v1203 = vpack.c.b16 %v1191, %v1190
    %v1204 = vpack.c.b16 %v1193, %v1192
    %v1205 = vpack.c.b16 %v1195, %v1194
    %v1206 = vpack.c.b16 %v1197, %v1196
    %v1207 = vpack.c.b16 %v1199, %v1198
    %1216 = vmatprep.subr.bf16.mxu0 0
    %1217 = vmatpush1.bf16.msra.mxu0 %v1200
    %1218 = vmatprep.subr.bf16.mxu0 0
    %1219 = vmatpush1.bf16.msra.mxu0 %v1201
    %1220 = vmatprep.subr.bf16.mxu0 0
    %1221 = vmatpush1.bf16.msra.mxu0 %v1202
    %1222 = vmatprep.subr.bf16.mxu0 0
    %1223 = vmatpush1.bf16.msra.mxu0 %v1203
    %1224 = vmatprep.subr.bf16.mxu0 0
    %1225 = vmatpush1.bf16.msra.mxu0 %v1204
    %1226 = vmatprep.subr.bf16.mxu0 0
    %1227 = vmatpush1.bf16.msra.mxu0 %v1205
    %1228 = vmatprep.subr.bf16.mxu0 0
    %1229 = vmatpush1.bf16.msra.mxu0 %v1206
    %1230 = vmatprep.subr.bf16.mxu0 0
    %1231 = vmatpush1.bf16.msra.mxu0 %v1207
    %1232 = vmatprep.subr.bf16.mxu0 0
    %1233 = vmatpush1.bf16.msra.mxu0 0
    %1234 = vmatprep.subr.bf16.mxu0 0
    %1235 = vmatpush1.bf16.msra.mxu0 0
    %1236 = vmatprep.subr.bf16.mxu0 0
    %1237 = vmatpush1.bf16.msra.mxu0 0
    %1238 = vmatprep.subr.bf16.mxu0 0
    %1239 = vmatpush1.bf16.msra.mxu0 0
    %1240 = vmatprep.subr.bf16.mxu0 0
    %1241 = vmatpush1.bf16.msra.mxu0 0
    %1242 = vmatprep.subr.bf16.mxu0 0
    %1243 = vmatpush1.bf16.msra.mxu0 0
    %1244 = vmatprep.subr.bf16.mxu0 0
    %1245 = vmatpush1.bf16.msra.mxu0 0
    %1246 = vmatprep.subr.bf16.mxu0 0
    %1247 = vmatpush1.bf16.msra.mxu0 0
    %1248 = vmatprep.mubr.bf16.mxu0 0
    %1249 = vmatmul.mubr.bf16.gmra.mrb[0].mxu0 %v1151
    %v1250 = vpop.f32.mrb[0].mxu0
    %v1251 = vadd.f32 0.0, %v1250
    %v1252 = vpop.f32.mrb[0].mxu0
    %v1253 = vpop.f32.mrb[0].mxu0
    %v1254 = vpop.f32.mrb[0].mxu0
    %1255 = vdwg.mxu0
    %v1256 = vmul.f32 %v997, %v1009
    %v1257 = vmul.f32 %v1256, %v1016
    %v1258 = vadd.f32 %v1257, %v1024
    %v1259 = vmul.f32 %v1258, 0.5
    %v1260 = vmul.f32 %v1258, 0.70710677
    %v1261 = verf.f32.pop %v1260
    %v1262 = vadd.f32 %v1261, 1.0
    %v1263 = vmul.f32 %v1259, %v1262
    %v1264 = vpack.c.bf16 %v1263, %v1263
    %1265 = vmatprep.subr.bf16.mxu0 0
    %1266 = vmatpush1.bf16.msra.mxu0 %v1088
    %1267 = vmatprep.subr.bf16.mxu0 0
    %1268 = vmatpush1.bf16.msra.mxu0 %v1089
    %1269 = vmatprep.subr.bf16.mxu0 0
    %1270 = vmatpush1.bf16.msra.mxu0 %v1090
    %1271 = vmatprep.subr.bf16.mxu0 0
    %1272 = vmatpush1.bf16.msra.mxu0 %v1091
    %1273 = vmatprep.subr.bf16.mxu0 0
    %1274 = vmatpush1.bf16.msra.mxu0 %v1092
    %1275 = vmatprep.subr.bf16.mxu0 0
    %1276 = vmatpush1.bf16.msra.mxu0 %v1093
    %1277 = vmatprep.subr.bf16.mxu0 0
    %1278 = vmatpush1.bf16.msra.mxu0 %v1094
    %1279 = vmatprep.subr.bf16.mxu0 0
    %1280 = vmatpush1.bf16.msra.mxu0 %v1095
    %1281 = vmatprep.subr.bf16.mxu0 0
    %1282 = vmatpush1.bf16.msra.mxu0 0
    %1283 = vmatprep.subr.bf16.mxu0 0
    %1284 = vmatpush1.bf16.msra.mxu0 0
    %1285 = vmatprep.subr.bf16.mxu0 0
    %1286 = vmatpush1.bf16.msra.mxu0 0
    %1287 = vmatprep.subr.bf16.mxu0 0
    %1288 = vmatpush1.bf16.msra.mxu0 0
    %1289 = vmatprep.subr.bf16.mxu0 0
    %1290 = vmatpush1.bf16.msra.mxu0 0
    %1291 = vmatprep.subr.bf16.mxu0 0
    %1292 = vmatpush1.bf16.msra.mxu0 0
    %1293 = vmatprep.subr.bf16.mxu0 0
    %1294 = vmatpush1.bf16.msra.mxu0 0
    %1295 = vmatprep.subr.bf16.mxu0 0
    %1296 = vmatpush1.bf16.msra.mxu0 0
    %1297 = vmatprep.mubr.bf16.mxu0 0
    %1298 = vmatmul.mubr.bf16.gmra.mrb[0].mxu0 %v1264
    %v1299 = vpop.f32.mrb[0].mxu0
    %v1300 = vadd.f32 %v1054, %v1299
    %v1301 = vpop.f32.mrb[0].mxu0
    %v1302 = vpop.f32.mrb[0].mxu0
    %v1303 = vpop.f32.mrb[0].mxu0
    %1304 = vdwg.mxu0
    %v1305 = vmul.f32 %v1300, %v1300
    %v1306 = vsel %vm969, %v1305, 0.0
    %1307 = vadd.xlane.f32.xlu0 %v1306
    %v1308 = vpop.xlane.xlu0 %1307
    %v1309 = vmax.f32 %v1308, 1e-24
    %v1310 = vrsqrt.pop %v1309
    %v1311 = vmul.f32 %v1300, %v1310
    %v1312 = vpack.c.bf16 %v1311, %v1311
    %1313 = vmatprep.subr.bf16.mxu0 0
    %1314 = vmatpush1.bf16.msra.mxu0 %v1200
    %1315 = vmatprep.subr.bf16.mxu0 0
    %1316 = vmatpush1.bf16.msra.mxu0 %v1201
    %1317 = vmatprep.subr.bf16.mxu0 0
    %1318 = vmatpush1.bf16.msra.mxu0 %v1202
    %1319 = vmatprep.subr.bf16.mxu0 0
    %1320 = vmatpush1.bf16.msra.mxu0 %v1203
    %1321 = vmatprep.subr.bf16.mxu0 0
    %1322 = vmatpush1.bf16.msra.mxu0 %v1204
    %1323 = vmatprep.subr.bf16.mxu0 0
    %1324 = vmatpush1.bf16.msra.mxu0 %v1205
    %1325 = vmatprep.subr.bf16.mxu0 0
    %1326 = vmatpush1.bf16.msra.mxu0 %v1206
    %1327 = vmatprep.subr.bf16.mxu0 0
    %1328 = vmatpush1.bf16.msra.mxu0 %v1207
    %1329 = vmatprep.subr.bf16.mxu0 0
    %1330 = vmatpush1.bf16.msra.mxu0 0
    %1331 = vmatprep.subr.bf16.mxu0 0
    %1332 = vmatpush1.bf16.msra.mxu0 0
    %1333 = vmatprep.subr.bf16.mxu0 0
    %1334 = vmatpush1.bf16.msra.mxu0 0
    %1335 = vmatprep.subr.bf16.mxu0 0
    %1336 = vmatpush1.bf16.msra.mxu0 0
    %1337 = vmatprep.subr.bf16.mxu0 0
    %1338 = vmatpush1.bf16.msra.mxu0 0
    %1339 = vmatprep.subr.bf16.mxu0 0
    %1340 = vmatpush1.bf16.msra.mxu0 0
    %1341 = vmatprep.subr.bf16.mxu0 0
    %1342 = vmatpush1.bf16.msra.mxu0 0
    %1343 = vmatprep.subr.bf16.mxu0 0
    %1344 = vmatpush1.bf16.msra.mxu0 0
    %1345 = vmatprep.mubr.bf16.mxu0 0
    %1346 = vmatmul.mubr.bf16.gmra.mrb[0].mxu0 %v1312
    %v1347 = vpop.f32.mrb[0].mxu0
    %v1348 = vadd.f32 0.0, %v1347
    %v1349 = vpop.f32.mrb[0].mxu0
    %v1350 = vpop.f32.mrb[0].mxu0
    %v1351 = vpop.f32.mrb[0].mxu0
    %1352 = vdwg.mxu0
    %v1353 = vld [vmem:[#allocation17] sm:$0x1]
    %v1354 = vlaneseq
    %v1355 = vand.u32 %v1354, 127
    %vm1356 = vcmp.lt.s32.totalorder %v1355, 128
    %v1357 = vmul.f32 %v811, 10.0
    %v1358 = vsel %vm1356, 1, 0
    %vm1359 = vcmp.eq.s32.totalorder %v1358, 1
    %v1360 = vsel %vm1359, %v1357, -1e+30
    %v1362 = vlaneseq
    %v1363 = vshrl.u32 %v1362, 7
    %v1364 = vsub.s32 0, %v1363
    %v1365 = vrot.slane %v1353, %v1364
    %v1367 = vsub.f32 %v1348, %v1365
    %v1368 = vmul.f32 %v1367, 25.0
    %v1369 = vsel %vm1359, %v1368, -1e+30
    %v1370 = vsel %vm969, %v1369, -inf
    %1371 = vmax.xlane.f32.xlu0 %v1370
    %v1372 = vpop.xlane.xlu0 %1371
    %v1373 = vsub.f32 %v1369, %v1372
    %v1374 = vmul.f32 %v1373, 1.442695
    %v1375 = vpow.pop %v1374
    %v1376 = vsel %vm969, %v1375, 0.0
    %1377 = vadd.xlane.f32.xlu0 %v1376
    %v1378 = vpop.xlane.xlu0 %1377
    %v1379 = vrcp.pop %v1378
    %v1380 = vmul.f32 %v1375, %v1379
    %v1381 = vlog2.pop %v1378
    %v1382 = vmul.f32 %v1381, 0.6931472
    %v1383 = vsub.f32 %v1373, %v1382
    %v1384 = vsel %vm969, %v1360, -inf
    %1385 = vmax.xlane.f32.xlu0 %v1384
    %v1386 = vpop.xlane.xlu0 %1385
    %v1387 = vsub.f32 %v1360, %v1386
    %v1388 = vmul.f32 %v1387, 1.442695
    %v1389 = vpow.pop %v1388
    %v1390 = vsel %vm969, %v1389, 0.0
    %1391 = vadd.xlane.f32.xlu0 %v1390
    %v1392 = vpop.xlane.xlu0 %1391
    %v1393 = vlog2.pop %v1392
    %v1394 = vmul.f32 %v1393, 0.6931472
    %v1395 = vadd.f32 %v1394, %v1386
    %v1396 = vsub.f32 %v1360, %v1395
    %v1397 = vmul.f32 %v1380, %v1396
    %v1398 = vsel %vm969, %v1397, 0.0
    %1399 = vadd.xlane.f32.xlu0 %v1398
    %v1400 = vpop.xlane.xlu0 %1399
    %v1401 = vsel %vm969, %v1400, 0.0
    %v1402 = vrot.slane %v1401, 4
    %v1403 = vadd.f32 %v1401, %v1402
    %v1404 = vrot.slane %v1403, 2
    %v1405 = vadd.f32 %v1403, %v1404
    %v1406 = vrot.slane %v1405, 1
    %v1407 = vadd.f32 %v1405, %v1406
    %v1408 = vrcp.pop 4.0
    %v1409 = vmul.f32 %v1407, %v1408
    %v1410 = vsub.f32 0.0, %v1409
    %v1411 = vmul.f32 %v1380, %v1383
    %v1412 = vsel %vm969, %v1411, 0.0
    %1413 = vadd.xlane.f32.xlu0 %v1412
    %v1414 = vpop.xlane.xlu0 %1413
    %v1415 = vsel %vm969, %v1414, 0.0
    %v1416 = vrot.slane %v1415, 4
    %v1417 = vadd.f32 %v1415, %v1416
    %v1418 = vrot.slane %v1417, 2
    %v1419 = vadd.f32 %v1417, %v1418
    %v1420 = vrot.slane %v1419, 1
    %v1421 = vadd.f32 %v1419, %v1420
    %v1422 = vmul.f32 %v1421, %v1408
    %v1423 = vsub.f32 0.0, %v1422
    %v1424 = vsel %vm969, %v1348, 0.0
    %v1425 = vrot.slane %v1424, 4
    %v1426 = vadd.f32 %v1424, %v1425
    %v1427 = vrot.slane %v1426, 2
    %v1428 = vadd.f32 %v1426, %v1427
    %v1429 = vrot.slane %v1428, 1
    %v1430 = vadd.f32 %v1428, %v1429
    %v1431 = vmul.f32 %v1430, %v1408
    %v1432 = vmul.f32 %v1353, 0.9
    %v1433 = vmul.f32 %v1431, 0.1
    %v1434 = vadd.f32 %v1432, %v1433
    %v1436 = vlaneseq
    %v1437 = vshrl.u32 %v1436, 7
    %v1438 = vsub.s32 0, %v1437
    %v1439 = vrot.slane %v1434, %v1438
    %v1441 = vsub.f32 %v1251, %v1439
    %v1442 = vmul.f32 %v1441, 25.0
    %v1443 = vsel %vm1359, %v1442, -1e+30
    %v1444 = vsel %vm969, %v1443, -inf
    %1445 = vmax.xlane.f32.xlu0 %v1444
    %v1446 = vpop.xlane.xlu0 %1445
    %v1447 = vsub.f32 %v1443, %v1446
    %v1448 = vmul.f32 %v1447, 1.442695
    %v1449 = vpow.pop %v1448
    %v1450 = vsel %vm969, %v1449, 0.0
    %1451 = vadd.xlane.f32.xlu0 %v1450
    %v1452 = vpop.xlane.xlu0 %1451
    %v1453 = vrcp.pop %v1452
    %v1454 = vmul.f32 %v1449, %v1453
    %v1455 = vlog2.pop %v1452
    %v1456 = vmul.f32 %v1455, 0.6931472
    %v1457 = vsub.f32 %v1447, %v1456
    %vm1458 = vcmask 1047556
    %v1459 = vsel %vm1458, %v1360, -inf
    %1460 = vmax.xlane.f32.xlu0 %v1459
    %v1461 = vpop.xlane.xlu0 %1460
    %v1462 = vsub.f32 %v1360, %v1461
    %v1463 = vmul.f32 %v1462, 1.442695
    %v1464 = vpow.pop %v1463
    %v1465 = vsel %vm1458, %v1464, 0.0
    %1466 = vadd.xlane.f32.xlu0 %v1465
    %v1467 = vpop.xlane.xlu0 %1466
    %v1468 = vlog2.pop %v1467
    %v1469 = vmul.f32 %v1468, 0.6931472
    %v1470 = vadd.f32 %v1469, %v1461
    %v1471 = vsub.f32 %v1360, %v1470
    %v1473 = vrot.slane %v1471, 4
    %v1475 = vmul.f32 %v1454, %v1473
    %v1476 = vsel %vm969, %v1475, 0.0
    %1477 = vadd.xlane.f32.xlu0 %v1476
    %v1478 = vpop.xlane.xlu0 %1477
    %v1479 = vsel %vm969, %v1478, 0.0
    %v1480 = vrot.slane %v1479, 4
    %v1481 = vadd.f32 %v1479, %v1480
    %v1482 = vrot.slane %v1481, 2
    %v1483 = vadd.f32 %v1481, %v1482
    %v1484 = vrot.slane %v1483, 1
    %v1485 = vadd.f32 %v1483, %v1484
    %v1486 = vmul.f32 %v1485, %v1408
    %v1487 = vsub.f32 0.0, %v1486
    %v1488 = vmul.f32 %v1454, %v1457
    %v1489 = vsel %vm969, %v1488, 0.0
    %1490 = vadd.xlane.f32.xlu0 %v1489
    %v1491 = vpop.xlane.xlu0 %1490
    %v1492 = vsel %vm969, %v1491, 0.0
    %v1493 = vrot.slane %v1492, 4
    %v1494 = vadd.f32 %v1492, %v1493
    %v1495 = vrot.slane %v1494, 2
    %v1496 = vadd.f32 %v1494, %v1495
    %v1497 = vrot.slane %v1496, 1
    %v1498 = vadd.f32 %v1496, %v1497
    %v1499 = vmul.f32 %v1498, %v1408
    %v1500 = vsub.f32 0.0, %v1499
    %v1501 = vsel %vm969, %v1251, 0.0
    %v1502 = vrot.slane %v1501, 4
    %v1503 = vadd.f32 %v1501, %v1502
    %v1504 = vrot.slane %v1503, 2
    %v1505 = vadd.f32 %v1503, %v1504
    %v1506 = vrot.slane %v1505, 1
    %v1507 = vadd.f32 %v1505, %v1506
    %v1508 = vmul.f32 %v1507, %v1408
    %v1509 = vmul.f32 %v1434, 0.9
    %v1510 = vmul.f32 %v1508, 0.1
    %v1511 = vadd.f32 %v1509, %v1510
    %v1512 = vadd.f32 %v1410, %v1487
    %v1513 = vmul.f32 %v1512, 0.5
    %v1514 = vadd.f32 %v1423, %v1500
    %v1515 = vmul.f32 %v1514, 0.5
    %vm1516 = vcmp.eq.s32.totalorder %v1355, 0
    %v1517 = vsel %vm1516, %v1513, 0.0
    %vm1518 = vcmp.eq.s32.totalorder %v1355, 1
    %v1519 = vsel %vm1518, %v1515, 0.0
    %v1520 = vadd.f32 %v1517, %v1519
    %1521 = vst [vmem:[#allocation19] sm:$0x1] %v1520
    %1522 = vst [vmem:[#allocation20] sm:$0x1] %v1511
    // Predicated region
    $region122: #{tpu_custom_call.1} parent=1 // pred_check
      _
    $region123: #{tpu_custom_call.1} parent=1 // pred_check_branch
      %1524 = sbr.rel (0) target = $region125
    $region124: #{tpu_custom_call.1} parent=1 // pred_region
      %s1526 = ssub.s32 16, 16
      %1527 = vsyncadd [#allocation4], %s1526
      %s1529 = sshll.u32 [#allocation19], 4
      %s1530 = int_to_ptr.vmem [resolvable:$true] %s1529
      %1532 = dma.vmem_to_hbm [thread:$0]  %s1530, 16, %s20, [#allocation4]
    $region125: #{tpu_custom_call.1} parent=1 // pred_fallthru
      _
    // Predicated region
    $region126: #{tpu_custom_call.1} parent=1 // pred_check
      _
    $region127: #{tpu_custom_call.1} parent=1 // pred_check_branch
      %1534 = sbr.rel (0) target = $region129
    $region128: #{tpu_custom_call.1} parent=1 // pred_region
      %s1536 = ssub.s32 16, 16
      %1537 = vsyncadd [#allocation21], %s1536
      %s1539 = sshll.u32 [#allocation20], 4
      %s1540 = int_to_ptr.vmem [resolvable:$true] %s1539
      %1542 = dma.vmem_to_hbm [thread:$0]  %s1540, 16, %s21, [#allocation21]
    $region129: #{tpu_custom_call.1} parent=1 // pred_fallthru
      _
    // Predicated region
    $region130: #{tpu_custom_call.1} parent=1 // pred_check
      _
    $region131: #{tpu_custom_call.1} parent=1 // pred_check_branch
      %1544 = sbr.rel (0) target = $region133
    $region132: #{tpu_custom_call.1} parent=1 // pred_region
      %1545 = dma.done [#allocation4], 16
    $region133: #{tpu_custom_call.1} parent=1 // pred_fallthru
      _
    // Predicated region
    $region134: #{tpu_custom_call.1} parent=1 // pred_check
      _
    $region135: #{tpu_custom_call.1} parent=1 // pred_check_branch
      %1547 = sbr.rel (0) target = $region137
    $region136: #{tpu_custom_call.1} parent=1 // pred_region
      %1548 = dma.done [#allocation21], 16
    $region137: #{tpu_custom_call.1} parent=1 // pred_fallthru
      _
    %1549 = vsyncpa [#allocation3], 1
    %1550 = vsyncpa [#allocation6], 1
    %1551 = vsyncpa [#allocation9], 1
    %1552 = vsyncpa [#allocation12], 1
    %1553 = vsyncpa [#allocation15], 1
    %1554 = vsyncpa [#allocation18], 1
    %1555 = vsyncpa [#allocation4], 1
    %1556 = vsyncpa [#allocation21], 1

</llo_original>
